<compile_context>
chip_gen: v7x
topology: tpu7x:2x2x1
jax: 0.10.0
libtpu: 0.0.40
codegen_flags: <defaults>
</compile_context>

<pallas_src>
import functools

import jax
import jax.numpy as jnp
from jax import lax
from jax.experimental import pallas as pl
from jax.experimental.pallas import tpu as pltpu


# ----------------------------- small helpers ------------------------------- #
def _round_up(x, m):
    return ((x + m - 1) // m) * m


def _compiler_params(sem, vmem_bytes):
    limit = int(min(max(32 * 1024 * 1024, 2 * vmem_bytes), 56 * 1024 * 1024))
    return pltpu.CompilerParams(dimension_semantics=sem, vmem_limit_bytes=limit)


# ------------------ kernel 1: projection  S = dinv * (X @ W) ---------------- #
def _proj_kernel(x_ref, w_ref, dinv_ref, o_ref):
    xw = jnp.dot(x_ref[...], w_ref[...], preferred_element_type=jnp.float32)
    o_ref[...] = (dinv_ref[...] * xw).astype(o_ref.dtype)


def project(x_bf, w_bf, dinv_col, *, tm):
    n, f = x_bf.shape
    h = w_bf.shape[1]
    vmem = 2 * (tm * f * 2 + f * h * 2 + tm * 4 + tm * h * 2)
    return pl.pallas_call(
        _proj_kernel,
        out_shape=jax.ShapeDtypeStruct((n, h), jnp.bfloat16),
        grid_spec=pltpu.PrefetchScalarGridSpec(
            num_scalar_prefetch=0,
            grid=(n // tm,),
            in_specs=[pl.BlockSpec((tm, f), lambda i: (i, 0)),
                      pl.BlockSpec((f, h), lambda i: (0, 0)),
                      pl.BlockSpec((tm, 1), lambda i: (i, 0))],
            out_specs=pl.BlockSpec((tm, h), lambda i: (i, 0)),
        ),
        compiler_params=_compiler_params(("parallel",), vmem),
        cost_estimate=pl.CostEstimate(
            flops=2 * n * f * h, transcendentals=0,
            bytes_accessed=(n * f + f * h + n * h) * 2 + n * 4),
    )(x_bf, w_bf, dinv_col)


# --------- kernel 2: propagation  H = relu(dinv * ((A+I) @ S) + b) ---------- #
def _prop_kernel(a_ref, xw_ref, dinv_ref, b_ref, o_ref, acc_ref, *, tk, xw_resident):
    k = pl.program_id(1)

    @pl.when(k == 0)
    def _():
        acc_ref[...] = jnp.zeros_like(acc_ref)

    if xw_resident:
        xw = xw_ref[pl.ds(pl.multiple_of(k * tk, tk), tk), :]
    else:
        xw = xw_ref[...]
    # int8 A tile (exact 0/1) -> bf16 in-register, bf16 MXU with f32 accumulation.
    acc_ref[...] += jnp.dot(a_ref[...].astype(jnp.bfloat16), xw,
                            preferred_element_type=jnp.float32)

    @pl.when(k == pl.num_programs(1) - 1)
    def _():
        o_ref[...] = jnp.maximum(dinv_ref[...] * acc_ref[...] + b_ref[...],
                                 0.0).astype(o_ref.dtype)


def propagate(a_i8, xw_bf, dinv_col, b_f32, *, tm, tk):
    n = a_i8.shape[0]
    h = xw_bf.shape[1]
    # Keep XW fully VMEM-resident (constant block index => one DMA) when it fits.
    xw_resident = (n * h * 2) <= (20 * 1024 * 1024)
    if xw_resident:
        xw_spec = pl.BlockSpec((n, h), lambda i, k: (0, 0))
        xw_vmem = 2 * n * h * 2
    else:
        xw_spec = pl.BlockSpec((tk, h), lambda i, k: (k, 0))
        xw_vmem = 2 * tk * h * 2
    vmem = (2 * tm * tk * 1 + xw_vmem
            + 2 * (tm * 4 + h * 4 + tm * h * 2) + tm * h * 4)
    kern = functools.partial(_prop_kernel, tk=tk, xw_resident=xw_resident)
    return pl.pallas_call(
        kern,
        out_shape=jax.ShapeDtypeStruct((n, h), jnp.bfloat16),
        grid_spec=pltpu.PrefetchScalarGridSpec(
            num_scalar_prefetch=0,
            grid=(n // tm, n // tk),
            in_specs=[pl.BlockSpec((tm, tk), lambda i, k: (i, k)),
                      xw_spec,
                      pl.BlockSpec((tm, 1), lambda i, k: (i, 0)),
                      pl.BlockSpec((1, h), lambda i, k: (0, 0))],
            out_specs=pl.BlockSpec((tm, h), lambda i, k: (i, 0)),
            scratch_shapes=[pltpu.VMEM((tm, h), jnp.float32)]),
        compiler_params=_compiler_params(("parallel", "arbitrary"), vmem),
        cost_estimate=pl.CostEstimate(
            flops=2 * n * n * h, transcendentals=0,
            bytes_accessed=n * n * 1 + 2 * n * h * 2 + n * 4 + h * 4),
    )(a_i8, xw_bf, dinv_col, b_f32)


# -------- kernel 3: mean-pool (bf16 MXU) + classifier + log_softmax --------- #
def _head_kernel(p_ref, h_ref, icnt_ref, wc_ref, bc_ref, o_ref, acc_ref, *,
                 num_classes):
    k = pl.program_id(0)

    @pl.when(k == 0)
    def _():
        acc_ref[...] = jnp.zeros_like(acc_ref)

    # 0/1 indicator (bf16) @ H (bf16) -> per-graph sums in f32.
    acc_ref[...] += jnp.dot(p_ref[...], h_ref[...],
                            preferred_element_type=jnp.float32)

    @pl.when(k == pl.num_programs(0) - 1)
    def _():
        pooled = icnt_ref[...] * acc_ref[...]          # exact mean in f32
        logits = jnp.dot(pooled, wc_ref[...],
                         preferred_element_type=jnp.float32) + bc_ref[...]
        lane = lax.broadcasted_iota(jnp.int32, logits.shape, 1)
        logits = jnp.where(lane < num_classes, logits, -1e30)
        m = jnp.max(logits, axis=1, keepdims=True)
        z = logits - m
        lse = jnp.log(jnp.sum(jnp.exp(z), axis=1, keepdims=True))
        o_ref[...] = z - lse


def head(pool_bf, h2_bf, icnt, wc_f32, bc_f32, *, tk, num_classes):
    g, n = pool_bf.shape
    hdim = h2_bf.shape[1]
    c = wc_f32.shape[1]
    vmem = (2 * (g * tk * 2 + tk * hdim * 2 + g * 4 + hdim * c * 4 + c * 4
                 + g * c * 4) + g * hdim * 4)
    return pl.pallas_call(
        functools.partial(_head_kernel, num_classes=num_classes),
        out_shape=jax.ShapeDtypeStruct((g, c), jnp.float32),
        grid_spec=pltpu.PrefetchScalarGridSpec(
            num_scalar_prefetch=0,
            grid=(n // tk,),
            in_specs=[pl.BlockSpec((g, tk), lambda k: (0, k)),
                      pl.BlockSpec((tk, hdim), lambda k: (k, 0)),
                      pl.BlockSpec((g, 1), lambda k: (0, 0)),
                      pl.BlockSpec((hdim, c), lambda k: (0, 0)),
                      pl.BlockSpec((1, c), lambda k: (0, 0))],
            out_specs=pl.BlockSpec((g, c), lambda k: (0, 0)),
            scratch_shapes=[pltpu.VMEM((g, hdim), jnp.float32)]),
        compiler_params=_compiler_params(("arbitrary",), vmem),
        cost_estimate=pl.CostEstimate(
            flops=2 * g * n * hdim + 2 * g * hdim * c,
            transcendentals=2 * g * c,
            bytes_accessed=g * n * 2 + n * hdim * 2 + hdim * c * 4),
    )(pool_bf, h2_bf, icnt, wc_f32, bc_f32)


# ------------------------------ full forward -------------------------------- #
def gnn_forward(a01, dinv, x, w1, b1, w2, b2, pool01, inv_cnt, wc, bc):
    n = a01.shape[0]
    g = pool01.shape[0]
    f, h1 = w1.shape
    h2 = w2.shape[1]
    c = wc.shape[1]

    f_pad = _round_up(f, 128)
    h1_pad = _round_up(h1, 128)
    h2_pad = _round_up(h2, 128)
    c_pad = _round_up(c, 128)
    g_pad = _round_up(g, 8)

    # Larger tiles; pad N up to a multiple of the chosen tiles (no 128 fallback).
    n128 = _round_up(n, 128)
    tm = min(512, n128)
    n_pad = _round_up(n128, tm)
    tk = min(2048, n_pad)
    n_pad = _round_up(n_pad, tk)

    def pad2(m, r, col):
        return jnp.pad(m, ((0, r - m.shape[0]), (0, col - m.shape[1])))

    a_i8 = pad2(a01, n_pad, n_pad).astype(jnp.int8)          # exact 0/1
    dinv_col = pad2(dinv[:, None], n_pad, 1).astype(jnp.float32)
    x_bf = pad2(x, n_pad, f_pad).astype(jnp.bfloat16)
    w1_bf = pad2(w1, f_pad, h1_pad).astype(jnp.bfloat16)
    w2_bf = pad2(w2, h1_pad, h2_pad).astype(jnp.bfloat16)
    b1_p = pad2(b1, 1, h1_pad).astype(jnp.float32)
    b2_p = pad2(b2, 1, h2_pad).astype(jnp.float32)
    pool_bf = pad2(pool01, g_pad, n_pad).astype(jnp.bfloat16)  # exact 0/1
    icnt_p = pad2(inv_cnt, g_pad, 1).astype(jnp.float32)
    wc_p = pad2(wc, h2_pad, c_pad).astype(jnp.float32)
    bc_p = pad2(bc, 1, c_pad).astype(jnp.float32)

    s1 = project(x_bf, w1_bf, dinv_col, tm=tm)                 # dinv * (X  @ W1)
    h1a = propagate(a_i8, s1, dinv_col, b1_p, tm=tm, tk=tk)    # relu GCN layer 1
    s2 = project(h1a, w2_bf, dinv_col, tm=tm)                  # dinv * (H1 @ W2)
    h2a = propagate(a_i8, s2, dinv_col, b2_p, tm=tm, tk=tk)    # relu GCN layer 2
    out = head(pool_bf, h2a, icnt_p, wc_p, bc_p, tk=tk, num_classes=c)
    return out[:g, :c]


# ----------------------------- JAX glue ------------------------------------- #
def build_adj_and_dinv(edge_index, num_nodes):
    """Dense 0/1 (A + I) (edges deduped) and the D^-1/2 vector (unit weights)."""
    src, dst = edge_index
    a = jnp.zeros((num_nodes, num_nodes), jnp.float32).at[dst, src].add(1.0)
    a = jnp.minimum(a, 1.0)                                     # dedup -> exact 0/1
    a = jnp.maximum(a, jnp.eye(num_nodes, dtype=jnp.float32))   # self loops
    deg = a.sum(axis=1)
    dinv = jnp.where(deg > 0, 1.0 / jnp.sqrt(deg), 0.0)
    return a, dinv


def build_pool(batch, num_graphs):
    """0/1 [G, N] indicator and exact 1/|graph| column, so mean = icnt*(P01 @ H)."""
    onehot = (batch[None, :] == jnp.arange(num_graphs)[:, None]).astype(jnp.float32)
    counts = onehot.sum(axis=1, keepdims=True)
    return onehot, 1.0 / jnp.maximum(counts, 1.0)


def glorot(key, shape):
    fan_in, fan_out = shape
    limit = jnp.sqrt(6.0 / (fan_in + fan_out))
    return jax.random.uniform(key, shape, jnp.float32, -limit, limit)


# ----------------------------- references ----------------------------------- #
def reference_matched(a01, dinv, x, w1, b1, w2, b2, pool01, inv_cnt, wc, bc):
    """Same factored / bf16-operand / f32-accumulate numerics as the kernels."""
    bf = jnp.bfloat16
    a_bf = a01.astype(bf)                # exact 0/1
    d = dinv[:, None]

    def gcn_layer(h_in, w, b):
        s = (d * jnp.dot(h_in.astype(bf), w.astype(bf),
                         preferred_element_type=jnp.float32)).astype(bf)
        agg = jnp.dot(a_bf, s, preferred_element_type=jnp.float32)
        return jnp.maximum(d * agg + b, 0.0).astype(bf)

    h1 = gcn_layer(x, w1, b1)
    h2 = gcn_layer(h1, w2, b2)
    pooled = inv_cnt * jnp.dot(pool01.astype(bf), h2,
                               preferred_element_type=jnp.float32)
    logits = pooled @ wc + bc
    return jax.nn.log_softmax(logits, axis=1)


def reference_f32(a01, dinv, x, w1, b1, w2, b2, pool01, inv_cnt, wc, bc):
    a_hat = dinv[:, None] * a01 * dinv[None, :]
    h1 = jnp.maximum(a_hat @ (x @ w1) + b1, 0.0)
    h2 = jnp.maximum(a_hat @ (h1 @ w2) + b2, 0.0)
    pooled = inv_cnt * (pool01 @ h2)
    logits = pooled @ wc + bc
    return jax.nn.log_softmax(logits, axis=1)


if __name__ == "__main__":
    num_features = 8
    num_classes = 4
    hidden1, hidden2 = 64, 32
    nodes_per_graph = 8
    num_graphs = 2
    num_nodes = nodes_per_graph * num_graphs

    key = jax.random.PRNGKey(0)
    k_x, k_w1, k_w2, k_wc = jax.random.split(key, 4)

    # node features
    x = jax.random.normal(k_x, (num_nodes, num_features), jnp.float32)

    # two ring graphs (undirected -> both directions), nodes 0-7 and 8-15
    src_list, dst_list = [], []
    for gidx in range(num_graphs):
        base = gidx * nodes_per_graph
        for i in range(nodes_per_graph):
            a, b = base + i, base + (i + 1) % nodes_per_graph
            src_list += [a, b]
            dst_list += [b, a]
    edge_index = (jnp.array(src_list, jnp.int32), jnp.array(dst_list, jnp.int32))
    batch = jnp.repeat(jnp.arange(num_graphs, dtype=jnp.int32), nodes_per_graph)

    # parameters (GCNConv: glorot weight, zero bias; Linear: glorot + zero bias)
    w1 = glorot(k_w1, (num_features, hidden1))
    b1 = jnp.zeros((1, hidden1), jnp.float32)
    w2 = glorot(k_w2, (hidden1, hidden2))
    b2 = jnp.zeros((1, hidden2), jnp.float32)
    wc = glorot(k_wc, (hidden2, num_classes))
    bc = jnp.zeros((1, num_classes), jnp.float32)

    a01, dinv = build_adj_and_dinv(edge_index, num_nodes)
    pool01, inv_cnt = build_pool(batch, num_graphs)

    args = (a01, dinv, x, w1, b1, w2, b2, pool01, inv_cnt, wc, bc)
    out = jax.jit(gnn_forward)(*args)
    out = jax.block_until_ready(out)

    ref_m = reference_matched(*args)
    ref_f = reference_f32(*args)

    assert out.shape == (num_graphs, num_classes)
    assert bool(jnp.all(jnp.isfinite(out)))
    assert jnp.allclose(out, ref_m, atol=2e-3, rtol=2e-3), \
        float(jnp.abs(out - ref_m).max())
    assert jnp.allclose(out, ref_f, atol=5e-2, rtol=5e-2), \
        float(jnp.abs(out - ref_f).max())

    print("KERNEL_OK")
</pallas_src>

<mosaic_0001>
module attributes {stable_mosaic.version = 11 : i64} {
  func.func @_proj_kernel(%arg0: i32, %arg1: memref<128x128xbf16, #tpu.memory_space<vmem>>, %arg2: memref<128x128xbf16, #tpu.memory_space<vmem>>, %arg3: memref<128x1xf32, #tpu.memory_space<vmem>>, %arg4: memref<128x128xbf16, #tpu.memory_space<vmem>>) attributes {dimension_semantics = [#tpu.dimension_semantics<parallel>], iteration_bounds = array<i64: 1>, scalar_prefetch = 0 : i64, scratch_operands = 0 : i64, tpu.core_type = #tpu.core_type<tc>, window_params = [{transform_indices = @transform_0, window_bounds = array<i64: 128, 128>}, {pipeline_mode = #tpu.pipeline_mode<synchronous>, transform_indices = @transform_1, window_bounds = array<i64: 128, 128>}, {transform_indices = @transform_2, window_bounds = array<i64: 128, 1>}, {transform_indices = @transform_3, window_bounds = array<i64: 128, 128>}]} {
    %c0 = arith.constant 0 : index
    %c0_0 = arith.constant 0 : index
    %0 = vector.load %arg1[%c0, %c0_0] : memref<128x128xbf16, #tpu.memory_space<vmem>>, vector<128x128xbf16>
    %c0_1 = arith.constant 0 : index
    %c0_2 = arith.constant 0 : index
    %1 = vector.load %arg2[%c0_1, %c0_2] : memref<128x128xbf16, #tpu.memory_space<vmem>>, vector<128x128xbf16>
    %cst = arith.constant dense<0.000000e+00> : vector<128x128xf32>
    %2 = tpu.matmul %0, %1, %cst {dimension_numbers = #tpu.dot_dimension_numbers<[1], [0], [0], [1], [0, 0, 1, 1], [], []>} : vector<128x128xbf16>, vector<128x128xbf16>, vector<128x128xf32> -> vector<128x128xf32>
    %c0_3 = arith.constant 0 : index
    %c0_4 = arith.constant 0 : index
    %3 = vector.load %arg3[%c0_3, %c0_4] : memref<128x1xf32, #tpu.memory_space<vmem>>, vector<128x1xf32>
    %4 = vector.broadcast %3 : vector<128x1xf32> to vector<128x128xf32>
    %5 = arith.mulf %4, %2 : vector<128x128xf32>
    %6 = arith.truncf %5 : vector<128x128xf32> to vector<128x128xbf16>
    %c0_5 = arith.constant 0 : index
    %c0_6 = arith.constant 0 : index
    %7 = vector.load %arg4[%c0_5, %c0_6] : memref<128x128xbf16, #tpu.memory_space<vmem>>, vector<128x128xbf16>
    tpu.vector_store %arg4[%c0_5, %c0_6], %6 {strides = array<i32>} : memref<128x128xbf16, #tpu.memory_space<vmem>>, vector<128x128xbf16>,
    return
  }
  func.func @transform_0(%arg0: i32) -> (i32, i32) {
    %c0_i32 = arith.constant 0 : i32
    %c0_i32_0 = arith.constant 0 : i32
    return %arg0, %c0_i32 : i32, i32
  }
  func.func @transform_1(%arg0: i32) -> (i32, i32) {
    %c0_i32 = arith.constant 0 : i32
    %c0_i32_0 = arith.constant 0 : i32
    %c0_i32_1 = arith.constant 0 : i32
    return %c0_i32, %c0_i32_0 : i32, i32
  }
  func.func @transform_2(%arg0: i32) -> (i32, i32) {
    %c0_i32 = arith.constant 0 : i32
    %c0_i32_0 = arith.constant 0 : i32
    return %arg0, %c0_i32 : i32, i32
  }
  func.func @transform_3(%arg0: i32) -> (i32, i32) {
    %c0_i32 = arith.constant 0 : i32
    %c0_i32_0 = arith.constant 0 : i32
    return %arg0, %c0_i32 : i32, i32
  }
}

module attributes {stable_mosaic.version = 11 : i64} {
  func.func @_prop_kernel(%arg0: i32, %arg1: i32, %arg2: memref<128x128xi8, #tpu.memory_space<vmem>>, %arg3: memref<128x128xbf16, #tpu.memory_space<vmem>>, %arg4: memref<128x1xf32, #tpu.memory_space<vmem>>, %arg5: memref<1x128xf32, #tpu.memory_space<vmem>>, %arg6: memref<128x128xbf16, #tpu.memory_space<vmem>>, %arg7: memref<128x128xf32, #tpu.memory_space<vmem>>) attributes {dimension_semantics = [#tpu.dimension_semantics<parallel>, #tpu.dimension_semantics<arbitrary>], iteration_bounds = array<i64: 1, 1>, scalar_prefetch = 0 : i64, scratch_operands = 1 : i64, tpu.core_type = #tpu.core_type<tc>, window_params = [{transform_indices = @transform_0, window_bounds = array<i64: 128, 128>}, {pipeline_mode = #tpu.pipeline_mode<synchronous>, transform_indices = @transform_1, window_bounds = array<i64: 128, 128>}, {transform_indices = @transform_2, window_bounds = array<i64: 128, 1>}, {pipeline_mode = #tpu.pipeline_mode<synchronous>, transform_indices = @transform_3, window_bounds = array<i64: 1, 128>}, {transform_indices = @transform_4, window_bounds = array<i64: 128, 128>}]} {
    %c0_i32 = arith.constant 0 : i32
    %0 = arith.cmpi eq, %arg1, %c0_i32 : i32
    %1 = arith.extui %0 : i1 to i32
    %c0_i32_0 = arith.constant 0 : i32
    %2 = arith.cmpi ne, %1, %c0_i32_0 : i32
    scf.if %2 {
      %cst_9 = arith.constant 0.000000e+00 : f32
      %16 = vector.broadcast %cst_9 : f32 to vector<128x128xf32>
      %c0_10 = arith.constant 0 : index
      %c0_11 = arith.constant 0 : index
      %17 = vector.load %arg7[%c0_10, %c0_11] : memref<128x128xf32, #tpu.memory_space<vmem>>, vector<128x128xf32>
      tpu.vector_store %arg7[%c0_10, %c0_11], %16 {strides = array<i32>} : memref<128x128xf32, #tpu.memory_space<vmem>>, vector<128x128xf32>,
    } else {
    }
    %c128_i32 = arith.constant 128 : i32
    %3 = arith.muli %arg1, %c128_i32 : i32
    %4 = tpu.assume_multiple %3, 128 : i32
    %5 = arith.index_cast %4 : i32 to index
    %c0 = arith.constant 0 : index
    %6 = vector.load %arg3[%5, %c0] : memref<128x128xbf16, #tpu.memory_space<vmem>>, vector<128x128xbf16>
    %c0_1 = arith.constant 0 : index
    %c0_2 = arith.constant 0 : index
    %7 = vector.load %arg7[%c0_1, %c0_2] : memref<128x128xf32, #tpu.memory_space<vmem>>, vector<128x128xf32>
    %c0_3 = arith.constant 0 : index
    %c0_4 = arith.constant 0 : index
    %8 = vector.load %arg2[%c0_3, %c0_4] : memref<128x128xi8, #tpu.memory_space<vmem>>, vector<128x128xi8>
    %9 = arith.sitofp %8 : vector<128x128xi8> to vector<128x128xbf16>
    %cst = arith.constant dense<0.000000e+00> : vector<128x128xf32>
    %10 = tpu.matmul %9, %6, %cst {dimension_numbers = #tpu.dot_dimension_numbers<[1], [0], [0], [1], [0, 0, 1, 1], [], []>} : vector<128x128xbf16>, vector<128x128xbf16>, vector<128x128xf32> -> vector<128x128xf32>
    %11 = arith.addf %7, %10 : vector<128x128xf32>
    %c0_5 = arith.constant 0 : index
    %c0_6 = arith.constant 0 : index
    %12 = vector.load %arg7[%c0_5, %c0_6] : memref<128x128xf32, #tpu.memory_space<vmem>>, vector<128x128xf32>
    tpu.vector_store %arg7[%c0_5, %c0_6], %11 {strides = array<i32>} : memref<128x128xf32, #tpu.memory_space<vmem>>, vector<128x128xf32>,
    %c0_i32_7 = arith.constant 0 : i32
    %13 = arith.cmpi eq, %arg1, %c0_i32_7 : i32
    %14 = arith.extui %13 : i1 to i32
    %c0_i32_8 = arith.constant 0 : i32
    %15 = arith.cmpi ne, %14, %c0_i32_8 : i32
    scf.if %15 {
      %c0_9 = arith.constant 0 : index
      %c0_10 = arith.constant 0 : index
      %16 = vector.load %arg4[%c0_9, %c0_10] : memref<128x1xf32, #tpu.memory_space<vmem>>, vector<128x1xf32>
      %c0_11 = arith.constant 0 : index
      %c0_12 = arith.constant 0 : index
      %17 = vector.load %arg7[%c0_11, %c0_12] : memref<128x128xf32, #tpu.memory_space<vmem>>, vector<128x128xf32>
      %18 = vector.broadcast %16 : vector<128x1xf32> to vector<128x128xf32>
      %19 = arith.mulf %18, %17 : vector<128x128xf32>
      %c0_13 = arith.constant 0 : index
      %c0_14 = arith.constant 0 : index
      %20 = vector.load %arg5[%c0_13, %c0_14] : memref<1x128xf32, #tpu.memory_space<vmem>>, vector<1x128xf32>
      %21 = vector.broadcast %20 : vector<1x128xf32> to vector<128x128xf32>
      %22 = arith.addf %19, %21 : vector<128x128xf32>
      %cst_15 = arith.constant 0.000000e+00 : f32
      %23 = vector.broadcast %cst_15 : f32 to vector<128x128xf32>
      %24 = arith.maximumf %22, %23 : vector<128x128xf32>
      %25 = arith.truncf %24 : vector<128x128xf32> to vector<128x128xbf16>
      %c0_16 = arith.constant 0 : index
      %c0_17 = arith.constant 0 : index
      %26 = vector.load %arg6[%c0_16, %c0_17] : memref<128x128xbf16, #tpu.memory_space<vmem>>, vector<128x128xbf16>
      tpu.vector_store %arg6[%c0_16, %c0_17], %25 {strides = array<i32>} : memref<128x128xbf16, #tpu.memory_space<vmem>>, vector<128x128xbf16>,
    } else {
    }
    return
  }
  func.func @transform_0(%arg0: i32, %arg1: i32) -> (i32, i32) {
    %c0_i32 = arith.constant 0 : i32
    return %arg0, %arg1 : i32, i32
  }
  func.func @transform_1(%arg0: i32, %arg1: i32) -> (i32, i32) {
    %c0_i32 = arith.constant 0 : i32
    %c0_i32_0 = arith.constant 0 : i32
    %c0_i32_1 = arith.constant 0 : i32
    return %c0_i32, %c0_i32_0 : i32, i32
  }
  func.func @transform_2(%arg0: i32, %arg1: i32) -> (i32, i32) {
    %c0_i32 = arith.constant 0 : i32
    %c0_i32_0 = arith.constant 0 : i32
    return %arg0, %c0_i32 : i32, i32
  }
  func.func @transform_3(%arg0: i32, %arg1: i32) -> (i32, i32) {
    %c0_i32 = arith.constant 0 : i32
    %c0_i32_0 = arith.constant 0 : i32
    %c0_i32_1 = arith.constant 0 : i32
    return %c0_i32, %c0_i32_0 : i32, i32
  }
  func.func @transform_4(%arg0: i32, %arg1: i32) -> (i32, i32) {
    %c0_i32 = arith.constant 0 : i32
    %c0_i32_0 = arith.constant 0 : i32
    return %arg0, %c0_i32 : i32, i32
  }
}

module attributes {stable_mosaic.version = 11 : i64} {
  func.func @_head_kernel(%arg0: i32, %arg1: memref<8x128xbf16, #tpu.memory_space<vmem>>, %arg2: memref<128x128xbf16, #tpu.memory_space<vmem>>, %arg3: memref<8x1xf32, #tpu.memory_space<vmem>>, %arg4: memref<128x128xf32, #tpu.memory_space<vmem>>, %arg5: memref<1x128xf32, #tpu.memory_space<vmem>>, %arg6: memref<8x128xf32, #tpu.memory_space<vmem>>, %arg7: memref<8x128xf32, #tpu.memory_space<vmem>>) attributes {dimension_semantics = [#tpu.dimension_semantics<arbitrary>], iteration_bounds = array<i64: 1>, scalar_prefetch = 0 : i64, scratch_operands = 1 : i64, tpu.core_type = #tpu.core_type<tc>, window_params = [{transform_indices = @transform_0, window_bounds = array<i64: 8, 128>}, {transform_indices = @transform_1, window_bounds = array<i64: 128, 128>}, {pipeline_mode = #tpu.pipeline_mode<synchronous>, transform_indices = @transform_2, window_bounds = array<i64: 8, 1>}, {pipeline_mode = #tpu.pipeline_mode<synchronous>, transform_indices = @transform_3, window_bounds = array<i64: 128, 128>}, {pipeline_mode = #tpu.pipeline_mode<synchronous>, transform_indices = @transform_4, window_bounds = array<i64: 1, 128>}, {pipeline_mode = #tpu.pipeline_mode<synchronous>, transform_indices = @transform_5, window_bounds = array<i64: 8, 128>}]} {
    %c0_i32 = arith.constant 0 : i32
    %0 = arith.cmpi eq, %arg0, %c0_i32 : i32
    %1 = arith.extui %0 : i1 to i32
    %c0_i32_0 = arith.constant 0 : i32
    %2 = arith.cmpi ne, %1, %c0_i32_0 : i32
    scf.if %2 {
      %cst_10 = arith.constant 0.000000e+00 : f32
      %12 = vector.broadcast %cst_10 : f32 to vector<8x128xf32>
      %c0_11 = arith.constant 0 : index
      %c0_12 = arith.constant 0 : index
      %13 = vector.load %arg7[%c0_11, %c0_12] : memref<8x128xf32, #tpu.memory_space<vmem>>, vector<8x128xf32>
      tpu.vector_store %arg7[%c0_11, %c0_12], %12 {strides = array<i32>} : memref<8x128xf32, #tpu.memory_space<vmem>>, vector<8x128xf32>,
    } else {
    }
    %c0 = arith.constant 0 : index
    %c0_1 = arith.constant 0 : index
    %3 = vector.load %arg7[%c0, %c0_1] : memref<8x128xf32, #tpu.memory_space<vmem>>, vector<8x128xf32>
    %c0_2 = arith.constant 0 : index
    %c0_3 = arith.constant 0 : index
    %4 = vector.load %arg1[%c0_2, %c0_3] : memref<8x128xbf16, #tpu.memory_space<vmem>>, vector<8x128xbf16>
    %c0_4 = arith.constant 0 : index
    %c0_5 = arith.constant 0 : index
    %5 = vector.load %arg2[%c0_4, %c0_5] : memref<128x128xbf16, #tpu.memory_space<vmem>>, vector<128x128xbf16>
    %cst = arith.constant dense<0.000000e+00> : vector<8x128xf32>
    %6 = tpu.matmul %4, %5, %cst {dimension_numbers = #tpu.dot_dimension_numbers<[1], [0], [0], [1], [0, 0, 1, 1], [], []>} : vector<8x128xbf16>, vector<128x128xbf16>, vector<8x128xf32> -> vector<8x128xf32>
    %7 = arith.addf %3, %6 : vector<8x128xf32>
    %c0_6 = arith.constant 0 : index
    %c0_7 = arith.constant 0 : index
    %8 = vector.load %arg7[%c0_6, %c0_7] : memref<8x128xf32, #tpu.memory_space<vmem>>, vector<8x128xf32>
    tpu.vector_store %arg7[%c0_6, %c0_7], %7 {strides = array<i32>} : memref<8x128xf32, #tpu.memory_space<vmem>>, vector<8x128xf32>,
    %c0_i32_8 = arith.constant 0 : i32
    %9 = arith.cmpi eq, %arg0, %c0_i32_8 : i32
    %10 = arith.extui %9 : i1 to i32
    %c0_i32_9 = arith.constant 0 : i32
    %11 = arith.cmpi ne, %10, %c0_i32_9 : i32
    scf.if %11 {
      %c0_10 = arith.constant 0 : index
      %c0_11 = arith.constant 0 : index
      %12 = vector.load %arg3[%c0_10, %c0_11] : memref<8x1xf32, #tpu.memory_space<vmem>>, vector<8x1xf32>
      %c0_12 = arith.constant 0 : index
      %c0_13 = arith.constant 0 : index
      %13 = vector.load %arg7[%c0_12, %c0_13] : memref<8x128xf32, #tpu.memory_space<vmem>>, vector<8x128xf32>
      %14 = vector.broadcast %12 : vector<8x1xf32> to vector<8x128xf32>
      %15 = arith.mulf %14, %13 : vector<8x128xf32>
      %c0_14 = arith.constant 0 : index
      %c0_15 = arith.constant 0 : index
      %16 = vector.load %arg4[%c0_14, %c0_15] : memref<128x128xf32, #tpu.memory_space<vmem>>, vector<128x128xf32>
      %cst_16 = arith.constant dense<0.000000e+00> : vector<8x128xf32>
      %17 = tpu.matmul %15, %16, %cst_16 {dimension_numbers = #tpu.dot_dimension_numbers<[1], [0], [0], [1], [0, 0, 1, 1], [], []>} : vector<8x128xf32>, vector<128x128xf32>, vector<8x128xf32> -> vector<8x128xf32>
      %c0_17 = arith.constant 0 : index
      %c0_18 = arith.constant 0 : index
      %18 = vector.load %arg5[%c0_17, %c0_18] : memref<1x128xf32, #tpu.memory_space<vmem>>, vector<1x128xf32>
      %19 = vector.broadcast %18 : vector<1x128xf32> to vector<8x128xf32>
      %20 = arith.addf %17, %19 : vector<8x128xf32>
      %21 = tpu.iota {dimensions = array<i32: 1>} : vector<8x128xi32>
      %c4_i32 = arith.constant 4 : i32
      %22 = vector.broadcast %c4_i32 : i32 to vector<8x128xi32>
      %23 = arith.cmpi slt, %21, %22 : vector<8x128xi32>
      %cst_19 = arith.constant -1.000000e+30 : f32
      %24 = vector.broadcast %cst_19 : f32 to vector<8x128xf32>
      %25 = arith.select %23, %20, %24 : vector<8x128xi1>, vector<8x128xf32>
      %cst_20 = arith.constant dense<0xFF800000> : vector<8xf32>
      %26 = vector.multi_reduction <maximumf>, %25, %cst_20 [1] : vector<8x128xf32> to vector<8xf32>
      %27 = vector.shape_cast %26 : vector<8xf32> to vector<8x1xf32>
      %28 = vector.broadcast %27 : vector<8x1xf32> to vector<8x128xf32>
      %29 = arith.subf %25, %28 : vector<8x128xf32>
      %30 = math.exp %29 : vector<8x128xf32>
      %cst_21 = arith.constant dense<0.000000e+00> : vector<8xf32>
      %31 = vector.multi_reduction <add>, %30, %cst_21 [1] : vector<8x128xf32> to vector<8xf32>
      %32 = vector.shape_cast %31 : vector<8xf32> to vector<8x1xf32>
      %33 = math.log %32 : vector<8x1xf32>
      %34 = vector.broadcast %33 : vector<8x1xf32> to vector<8x128xf32>
      %35 = arith.subf %29, %34 : vector<8x128xf32>
      %c0_22 = arith.constant 0 : index
      %c0_23 = arith.constant 0 : index
      %36 = vector.load %arg6[%c0_22, %c0_23] : memref<8x128xf32, #tpu.memory_space<vmem>>, vector<8x128xf32>
      tpu.vector_store %arg6[%c0_22, %c0_23], %35 {strides = array<i32>} : memref<8x128xf32, #tpu.memory_space<vmem>>, vector<8x128xf32>,
    } else {
    }
    return
  }
  func.func @transform_0(%arg0: i32) -> (i32, i32) {
    %c0_i32 = arith.constant 0 : i32
    %c0_i32_0 = arith.constant 0 : i32
    return %c0_i32, %arg0 : i32, i32
  }
  func.func @transform_1(%arg0: i32) -> (i32, i32) {
    %c0_i32 = arith.constant 0 : i32
    %c0_i32_0 = arith.constant 0 : i32
    return %arg0, %c0_i32 : i32, i32
  }
  func.func @transform_2(%arg0: i32) -> (i32, i32) {
    %c0_i32 = arith.constant 0 : i32
    %c0_i32_0 = arith.constant 0 : i32
    %c0_i32_1 = arith.constant 0 : i32
    return %c0_i32, %c0_i32_0 : i32, i32
  }
  func.func @transform_3(%arg0: i32) -> (i32, i32) {
    %c0_i32 = arith.constant 0 : i32
    %c0_i32_0 = arith.constant 0 : i32
    %c0_i32_1 = arith.constant 0 : i32
    return %c0_i32, %c0_i32_0 : i32, i32
  }
  func.func @transform_4(%arg0: i32) -> (i32, i32) {
    %c0_i32 = arith.constant 0 : i32
    %c0_i32_0 = arith.constant 0 : i32
    %c0_i32_1 = arith.constant 0 : i32
    return %c0_i32, %c0_i32_0 : i32, i32
  }
  func.func @transform_5(%arg0: i32) -> (i32, i32) {
    %c0_i32 = arith.constant 0 : i32
    %c0_i32_0 = arith.constant 0 : i32
    %c0_i32_1 = arith.constant 0 : i32
    return %c0_i32, %c0_i32_0 : i32, i32
  }
}

</mosaic_0001>

<llo_original>
// kernel: gnn_forward.5
$region0: #{gnn_forward.5}
  #allocation0 [shape = 'u32[]', space=smem, size = 0x4, offset = 0x4, fixed_abs, tag = 'smem constant byte address 0x4 - core index']
  #allocation1 [shape = 'u32[144,128]{1,0:T(1,128)}', space=vmem, size = 0x12000, scoped, tag = 'internal scratch']
  %s0 = inlined_call_operand.vmem [shape: bf16[128,128], index: 0, kind: input, shape index: {}]
  %s1 = inlined_call_operand.vmem [shape: bf16[128,128], index: 1, kind: input, shape index: {}]
  %s2 = inlined_call_operand.vmem [shape: f32[128,1], index: 2, kind: input, shape index: {}]
  %s3 = inlined_call_operand.vmem [shape: bf16[128,128], index: 3, kind: output, shape index: {}]
  %s4 = sld [smem:[#allocation0]]
  $region22: #{gnn_forward.5} parent=0
    _
  %s6 = ssub.s32 1, %s4
  %s7 = scalar_select 0, %s6, %s4
  // Predicated region
  $region2: #{gnn_forward.5} parent=0 // pred_check
    _
  $region3: #{gnn_forward.5} parent=0 // pred_check_branch
    %9 = sbr.rel (0) target = $region5
  $region4: #{gnn_forward.5} parent=0 // pred_region
    _
  $region5: #{gnn_forward.5} parent=0 // pred_fallthru
    _
  // Predicated region
  $region6: #{gnn_forward.5} parent=0 // pred_check
    _
  $region7: #{gnn_forward.5} parent=0 // pred_check_branch
    %11 = sbr.rel (0) target = $region9
  $region8: #{gnn_forward.5} parent=0 // pred_region
    _
  $region9: #{gnn_forward.5} parent=0 // pred_fallthru
    _
  // Predicated region
  $region10: #{gnn_forward.5} parent=0 // pred_check
    _
  $region11: #{gnn_forward.5} parent=0 // pred_check_branch
    %13 = sbr.rel (0) target = $region13
  $region12: #{gnn_forward.5} parent=0 // pred_region
    _
  $region13: #{gnn_forward.5} parent=0 // pred_fallthru
    _
  %v15 = vld [vmem:[%s0] sm:$0xf]
  %v16 = vld [vmem:[%s0 + $0x4] sm:$0xf]
  %v17 = vld [vmem:[%s0 + $0x8] sm:$0xf]
  %v18 = vld [vmem:[%s0 + $0xc] sm:$0xf]
  %v19 = vld [vmem:[%s0 + $0x10] sm:$0xf]
  %v20 = vld [vmem:[%s0 + $0x14] sm:$0xf]
  %v21 = vld [vmem:[%s0 + $0x18] sm:$0xf]
  %v22 = vld [vmem:[%s0 + $0x1c] sm:$0xf]
  %v23 = vld [vmem:[%s0 + $0x20] sm:$0xf]
  %v24 = vld [vmem:[%s0 + $0x24] sm:$0xf]
  %v25 = vld [vmem:[%s0 + $0x28] sm:$0xf]
  %v26 = vld [vmem:[%s0 + $0x2c] sm:$0xf]
  %v27 = vld [vmem:[%s0 + $0x30] sm:$0xf]
  %v28 = vld [vmem:[%s0 + $0x34] sm:$0xf]
  %v29 = vld [vmem:[%s0 + $0x38] sm:$0xf]
  %v30 = vld [vmem:[%s0 + $0x3c] sm:$0xf]
  %v31 = vld [vmem:[%s1] sm:$0xf]
  %v32 = vld [vmem:[%s1 + $0x4] sm:$0xf]
  %v33 = vld [vmem:[%s1 + $0x8] sm:$0xf]
  %v34 = vld [vmem:[%s1 + $0xc] sm:$0xf]
  %v35 = vld [vmem:[%s1 + $0x10] sm:$0xf]
  %v36 = vld [vmem:[%s1 + $0x14] sm:$0xf]
  %v37 = vld [vmem:[%s1 + $0x18] sm:$0xf]
  %v38 = vld [vmem:[%s1 + $0x1c] sm:$0xf]
  %v39 = vld [vmem:[%s1 + $0x20] sm:$0xf]
  %v40 = vld [vmem:[%s1 + $0x24] sm:$0xf]
  %v41 = vld [vmem:[%s1 + $0x28] sm:$0xf]
  %v42 = vld [vmem:[%s1 + $0x2c] sm:$0xf]
  %v43 = vld [vmem:[%s1 + $0x30] sm:$0xf]
  %v44 = vld [vmem:[%s1 + $0x34] sm:$0xf]
  %v45 = vld [vmem:[%s1 + $0x38] sm:$0xf]
  %v46 = vld [vmem:[%s1 + $0x3c] sm:$0xf]
  %v63 = vunpack.c.l.b16 %v15
  %v64 = vunpack.c.l.b16 %v16
  %v65 = vunpack.c.l.b16 %v17
  %v66 = vunpack.c.l.b16 %v18
  %v67 = vunpack.c.l.b16 %v19
  %v68 = vunpack.c.l.b16 %v20
  %v69 = vunpack.c.l.b16 %v21
  %v70 = vunpack.c.l.b16 %v22
  %v71 = vunpack.c.l.b16 %v23
  %v72 = vunpack.c.l.b16 %v24
  %v73 = vunpack.c.l.b16 %v25
  %v74 = vunpack.c.l.b16 %v26
  %v75 = vunpack.c.l.b16 %v27
  %v76 = vunpack.c.l.b16 %v28
  %v77 = vunpack.c.l.b16 %v29
  %v78 = vunpack.c.l.b16 %v30
  %v79 = vpack.c.b16 %v64, %v63
  %v80 = vpack.c.b16 %v66, %v65
  %v81 = vpack.c.b16 %v68, %v67
  %v82 = vpack.c.b16 %v70, %v69
  %v83 = vpack.c.b16 %v72, %v71
  %v84 = vpack.c.b16 %v74, %v73
  %v85 = vpack.c.b16 %v76, %v75
  %v86 = vpack.c.b16 %v78, %v77
  %v111 = vunpack.c.l.b16 %v31
  %v112 = vunpack.c.l.b16 %v32
  %v113 = vunpack.c.l.b16 %v33
  %v114 = vunpack.c.l.b16 %v34
  %v115 = vunpack.c.l.b16 %v35
  %v116 = vunpack.c.l.b16 %v36
  %v117 = vunpack.c.l.b16 %v37
  %v118 = vunpack.c.l.b16 %v38
  %v119 = vunpack.c.l.b16 %v39
  %v120 = vunpack.c.l.b16 %v40
  %v121 = vunpack.c.l.b16 %v41
  %v122 = vunpack.c.l.b16 %v42
  %v123 = vunpack.c.l.b16 %v43
  %v124 = vunpack.c.l.b16 %v44
  %v125 = vunpack.c.l.b16 %v45
  %v126 = vunpack.c.l.b16 %v46
  %v127 = vpack.c.b16 %v112, %v111
  %v128 = vpack.c.b16 %v114, %v113
  %v129 = vpack.c.b16 %v116, %v115
  %v130 = vpack.c.b16 %v118, %v117
  %v131 = vpack.c.b16 %v120, %v119
  %v132 = vpack.c.b16 %v122, %v121
  %v133 = vpack.c.b16 %v124, %v123
  %v134 = vpack.c.b16 %v126, %v125
  %143 = vmatprep.subr.bf16.mxu0 0
  %144 = vmatpush1.bf16.msra.mxu0 %v127
  %145 = vmatprep.subr.bf16.mxu0 0
  %146 = vmatpush1.bf16.msra.mxu0 %v128
  %147 = vmatprep.subr.bf16.mxu0 0
  %148 = vmatpush1.bf16.msra.mxu0 %v129
  %149 = vmatprep.subr.bf16.mxu0 0
  %150 = vmatpush1.bf16.msra.mxu0 %v130
  %151 = vmatprep.subr.bf16.mxu0 0
  %152 = vmatpush1.bf16.msra.mxu0 %v131
  %153 = vmatprep.subr.bf16.mxu0 0
  %154 = vmatpush1.bf16.msra.mxu0 %v132
  %155 = vmatprep.subr.bf16.mxu0 0
  %156 = vmatpush1.bf16.msra.mxu0 %v133
  %157 = vmatprep.subr.bf16.mxu0 0
  %158 = vmatpush1.bf16.msra.mxu0 %v134
  %159 = vmatprep.subr.bf16.mxu0 0
  %160 = vmatpush1.bf16.msra.mxu0 0
  %161 = vmatprep.subr.bf16.mxu0 0
  %162 = vmatpush1.bf16.msra.mxu0 0
  %163 = vmatprep.subr.bf16.mxu0 0
  %164 = vmatpush1.bf16.msra.mxu0 0
  %165 = vmatprep.subr.bf16.mxu0 0
  %166 = vmatpush1.bf16.msra.mxu0 0
  %167 = vmatprep.subr.bf16.mxu0 0
  %168 = vmatpush1.bf16.msra.mxu0 0
  %169 = vmatprep.subr.bf16.mxu0 0
  %170 = vmatpush1.bf16.msra.mxu0 0
  %171 = vmatprep.subr.bf16.mxu0 0
  %172 = vmatpush1.bf16.msra.mxu0 0
  %173 = vmatprep.subr.bf16.mxu0 0
  %174 = vmatpush1.bf16.msra.mxu0 0
  %175 = vmatprep.mubr.bf16.mxu0 0
  %176 = vmatmul.mubr.bf16.gmra.mrb[0].mxu0 %v79
  %v177 = vpop.f32.mrb[0].mxu0
  %v178 = vadd.f32 0.0, %v177
  %v179 = vpop.f32.mrb[0].mxu0
  %v180 = vpop.f32.mrb[0].mxu0
  %v181 = vadd.f32 0.0, %v180
  %v182 = vpop.f32.mrb[0].mxu0
  %183 = vmatprep.mubr.bf16.mxu0 0
  %184 = vmatmul.mubr.bf16.gmra.mrb[0].mxu0 %v80
  %v185 = vpop.f32.mrb[0].mxu0
  %v186 = vadd.f32 0.0, %v185
  %v187 = vpop.f32.mrb[0].mxu0
  %v188 = vpop.f32.mrb[0].mxu0
  %v189 = vadd.f32 0.0, %v188
  %v190 = vpop.f32.mrb[0].mxu0
  %191 = vmatprep.mubr.bf16.mxu0 0
  %192 = vmatmul.mubr.bf16.gmra.mrb[0].mxu0 %v81
  %v193 = vpop.f32.mrb[0].mxu0
  %v194 = vadd.f32 0.0, %v193
  %v195 = vpop.f32.mrb[0].mxu0
  %v196 = vpop.f32.mrb[0].mxu0
  %v197 = vadd.f32 0.0, %v196
  %v198 = vpop.f32.mrb[0].mxu0
  %199 = vmatprep.mubr.bf16.mxu0 0
  %200 = vmatmul.mubr.bf16.gmra.mrb[0].mxu0 %v82
  %v201 = vpop.f32.mrb[0].mxu0
  %v202 = vadd.f32 0.0, %v201
  %v203 = vpop.f32.mrb[0].mxu0
  %v204 = vpop.f32.mrb[0].mxu0
  %v205 = vadd.f32 0.0, %v204
  %v206 = vpop.f32.mrb[0].mxu0
  %207 = vmatprep.mubr.bf16.mxu0 0
  %208 = vmatmul.mubr.bf16.gmra.mrb[0].mxu0 %v83
  %v209 = vpop.f32.mrb[0].mxu0
  %v210 = vadd.f32 0.0, %v209
  %v211 = vpop.f32.mrb[0].mxu0
  %v212 = vpop.f32.mrb[0].mxu0
  %v213 = vadd.f32 0.0, %v212
  %v214 = vpop.f32.mrb[0].mxu0
  %215 = vmatprep.mubr.bf16.mxu0 0
  %216 = vmatmul.mubr.bf16.gmra.mrb[0].mxu0 %v84
  %v217 = vpop.f32.mrb[0].mxu0
  %v218 = vadd.f32 0.0, %v217
  %v219 = vpop.f32.mrb[0].mxu0
  %v220 = vpop.f32.mrb[0].mxu0
  %v221 = vadd.f32 0.0, %v220
  %v222 = vpop.f32.mrb[0].mxu0
  %223 = vmatprep.mubr.bf16.mxu0 0
  %224 = vmatmul.mubr.bf16.gmra.mrb[0].mxu0 %v85
  %v225 = vpop.f32.mrb[0].mxu0
  %v226 = vadd.f32 0.0, %v225
  %v227 = vpop.f32.mrb[0].mxu0
  %v228 = vpop.f32.mrb[0].mxu0
  %v229 = vadd.f32 0.0, %v228
  %v230 = vpop.f32.mrb[0].mxu0
  %231 = vmatprep.mubr.bf16.mxu0 0
  %232 = vmatmul.mubr.bf16.gmra.mrb[0].mxu0 %v86
  %v233 = vpop.f32.mrb[0].mxu0
  %v234 = vadd.f32 0.0, %v233
  %v235 = vpop.f32.mrb[0].mxu0
  %v236 = vpop.f32.mrb[0].mxu0
  %v237 = vadd.f32 0.0, %v236
  %v238 = vpop.f32.mrb[0].mxu0
  %239 = vdwg.mxu0
  %v240 = vld [vmem:[%s2] sm:$0xff]
  %v241 = vld [vmem:[%s2 + $0x8] sm:$0xff]
  %v242 = vld [vmem:[%s2 + $0x10] sm:$0xff]
  %v243 = vld [vmem:[%s2 + $0x18] sm:$0xff]
  %v244 = vld [vmem:[%s2 + $0x20] sm:$0xff]
  %v245 = vld [vmem:[%s2 + $0x28] sm:$0xff]
  %v246 = vld [vmem:[%s2 + $0x30] sm:$0xff]
  %v247 = vld [vmem:[%s2 + $0x38] sm:$0xff]
  %v248 = vld [vmem:[%s2 + $0x40] sm:$0xff]
  %v249 = vld [vmem:[%s2 + $0x48] sm:$0xff]
  %v250 = vld [vmem:[%s2 + $0x50] sm:$0xff]
  %v251 = vld [vmem:[%s2 + $0x58] sm:$0xff]
  %v252 = vld [vmem:[%s2 + $0x60] sm:$0xff]
  %v253 = vld [vmem:[%s2 + $0x68] sm:$0xff]
  %v254 = vld [vmem:[%s2 + $0x70] sm:$0xff]
  %v255 = vld [vmem:[%s2 + $0x78] sm:$0xff]
  %257 = vset.pattern.permute.xlu0 0
  %258 = vperm.xlu0 %257, %v240
  %v259 = vpop.permute.xlu0 %258
  %262 = vset.pattern.permute.xlu0 0
  %263 = vperm.xlu0 %262, %v241
  %v264 = vpop.permute.xlu0 %263
  %267 = vset.pattern.permute.xlu0 0
  %268 = vperm.xlu0 %267, %v242
  %v269 = vpop.permute.xlu0 %268
  %272 = vset.pattern.permute.xlu0 0
  %273 = vperm.xlu0 %272, %v243
  %v274 = vpop.permute.xlu0 %273
  %277 = vset.pattern.permute.xlu0 0
  %278 = vperm.xlu0 %277, %v244
  %v279 = vpop.permute.xlu0 %278
  %282 = vset.pattern.permute.xlu0 0
  %283 = vperm.xlu0 %282, %v245
  %v284 = vpop.permute.xlu0 %283
  %287 = vset.pattern.permute.xlu0 0
  %288 = vperm.xlu0 %287, %v246
  %v289 = vpop.permute.xlu0 %288
  %292 = vset.pattern.permute.xlu0 0
  %293 = vperm.xlu0 %292, %v247
  %v294 = vpop.permute.xlu0 %293
  %297 = vset.pattern.permute.xlu0 0
  %298 = vperm.xlu0 %297, %v248
  %v299 = vpop.permute.xlu0 %298
  %302 = vset.pattern.permute.xlu0 0
  %303 = vperm.xlu0 %302, %v249
  %v304 = vpop.permute.xlu0 %303
  %307 = vset.pattern.permute.xlu0 0
  %308 = vperm.xlu0 %307, %v250
  %v309 = vpop.permute.xlu0 %308
  %312 = vset.pattern.permute.xlu0 0
  %313 = vperm.xlu0 %312, %v251
  %v314 = vpop.permute.xlu0 %313
  %317 = vset.pattern.permute.xlu0 0
  %318 = vperm.xlu0 %317, %v252
  %v319 = vpop.permute.xlu0 %318
  %322 = vset.pattern.permute.xlu0 0
  %323 = vperm.xlu0 %322, %v253
  %v324 = vpop.permute.xlu0 %323
  %327 = vset.pattern.permute.xlu0 0
  %328 = vperm.xlu0 %327, %v254
  %v329 = vpop.permute.xlu0 %328
  %332 = vset.pattern.permute.xlu0 0
  %333 = vperm.xlu0 %332, %v255
  %v334 = vpop.permute.xlu0 %333
  %v336 = vmul.f32 %v259, %v178
  %v337 = vmul.f32 %v264, %v181
  %v338 = vmul.f32 %v269, %v186
  %v339 = vmul.f32 %v274, %v189
  %v340 = vmul.f32 %v279, %v194
  %v341 = vmul.f32 %v284, %v197
  %v342 = vmul.f32 %v289, %v202
  %v343 = vmul.f32 %v294, %v205
  %v344 = vmul.f32 %v299, %v210
  %v345 = vmul.f32 %v304, %v213
  %v346 = vmul.f32 %v309, %v218
  %v347 = vmul.f32 %v314, %v221
  %v348 = vmul.f32 %v319, %v226
  %v349 = vmul.f32 %v324, %v229
  %v350 = vmul.f32 %v329, %v234
  %v351 = vmul.f32 %v334, %v237
  %v352 = vpack.c.bf16 %v337, %v336
  %v353 = vpack.c.bf16 %v339, %v338
  %v354 = vpack.c.bf16 %v341, %v340
  %v355 = vpack.c.bf16 %v343, %v342
  %v356 = vpack.c.bf16 %v345, %v344
  %v357 = vpack.c.bf16 %v347, %v346
  %v358 = vpack.c.bf16 %v349, %v348
  %v359 = vpack.c.bf16 %v351, %v350
  %v368 = vunpack.c.l.b16 %v352
  %v369 = vunpack.c.h.b16 %v352
  %v370 = vunpack.c.l.b16 %v353
  %v371 = vunpack.c.h.b16 %v353
  %v372 = vunpack.c.l.b16 %v354
  %v373 = vunpack.c.h.b16 %v354
  %v374 = vunpack.c.l.b16 %v355
  %v375 = vunpack.c.h.b16 %v355
  %v376 = vunpack.c.l.b16 %v356
  %v377 = vunpack.c.h.b16 %v356
  %v378 = vunpack.c.l.b16 %v357
  %v379 = vunpack.c.h.b16 %v357
  %v380 = vunpack.c.l.b16 %v358
  %v381 = vunpack.c.h.b16 %v358
  %v382 = vunpack.c.l.b16 %v359
  %v383 = vunpack.c.h.b16 %v359
  %v384 = vpack.c.b16 %v368, %v368
  %v385 = vpack.c.b16 %v369, %v369
  %v386 = vpack.c.b16 %v370, %v370
  %v387 = vpack.c.b16 %v371, %v371
  %v388 = vpack.c.b16 %v372, %v372
  %v389 = vpack.c.b16 %v373, %v373
  %v390 = vpack.c.b16 %v374, %v374
  %v391 = vpack.c.b16 %v375, %v375
  %v392 = vpack.c.b16 %v376, %v376
  %v393 = vpack.c.b16 %v377, %v377
  %v394 = vpack.c.b16 %v378, %v378
  %v395 = vpack.c.b16 %v379, %v379
  %v396 = vpack.c.b16 %v380, %v380
  %v397 = vpack.c.b16 %v381, %v381
  %v398 = vpack.c.b16 %v382, %v382
  %v399 = vpack.c.b16 %v383, %v383
  %416 = vst [vmem:[%s3] sm:$0xf] %v384
  %417 = vst [vmem:[%s3 + $0x4] sm:$0xf] %v385
  %418 = vst [vmem:[%s3 + $0x8] sm:$0xf] %v386
  %419 = vst [vmem:[%s3 + $0xc] sm:$0xf] %v387
  %420 = vst [vmem:[%s3 + $0x10] sm:$0xf] %v388
  %421 = vst [vmem:[%s3 + $0x14] sm:$0xf] %v389
  %422 = vst [vmem:[%s3 + $0x18] sm:$0xf] %v390
  %423 = vst [vmem:[%s3 + $0x1c] sm:$0xf] %v391
  %424 = vst [vmem:[%s3 + $0x20] sm:$0xf] %v392
  %425 = vst [vmem:[%s3 + $0x24] sm:$0xf] %v393
  %426 = vst [vmem:[%s3 + $0x28] sm:$0xf] %v394
  %427 = vst [vmem:[%s3 + $0x2c] sm:$0xf] %v395
  %428 = vst [vmem:[%s3 + $0x30] sm:$0xf] %v396
  %429 = vst [vmem:[%s3 + $0x34] sm:$0xf] %v397
  %430 = vst [vmem:[%s3 + $0x38] sm:$0xf] %v398
  %431 = vst [vmem:[%s3 + $0x3c] sm:$0xf] %v399
  // Predicated region
  $region14: #{gnn_forward.5} parent=0 // pred_check
    _
  $region15: #{gnn_forward.5} parent=0 // pred_check_branch
    %433 = sbr.rel (0) target = $region17
  $region16: #{gnn_forward.5} parent=0 // pred_region
    _
  $region17: #{gnn_forward.5} parent=0 // pred_fallthru
    _
  // Predicated region
  $region18: #{gnn_forward.5} parent=0 // pred_check
    _
  $region19: #{gnn_forward.5} parent=0 // pred_check_branch
    %435 = sbr.rel (0) target = $region21
  $region20: #{gnn_forward.5} parent=0 // pred_region
    _
  $region21: #{gnn_forward.5} parent=0 // pred_fallthru
    _

// kernel: gnn_forward.6
$region0: #{gnn_forward.6}
  #allocation0 [shape = 'u32[]', space=smem, size = 0x4, offset = 0x4, fixed_abs, tag = 'smem constant byte address 0x4 - core index']
  #allocation1 [shape = 'u32[144,128]{1,0:T(1,128)}', space=vmem, size = 0x12000, scoped, tag = 'internal scratch']
  #allocation2 [shape = 'f32[128,128]{1,0:T(8,128)}', space=vmem, size = 0x10000, scoped, tag = 'scratch operand']
  %s0 = inlined_call_operand.vmem [shape: s8[128,128], index: 0, kind: input, shape index: {}]
  %s1 = inlined_call_operand.vmem [shape: bf16[128,128], index: 1, kind: input, shape index: {}]
  %s2 = inlined_call_operand.vmem [shape: f32[128,1], index: 2, kind: input, shape index: {}]
  %s3 = inlined_call_operand.vmem [shape: f32[1,128], index: 3, kind: input, shape index: {}]
  %s4 = inlined_call_operand.vmem [shape: bf16[128,128], index: 4, kind: output, shape index: {}]
  %s5 = sld [smem:[#allocation0]]
  $region34: #{gnn_forward.6} parent=0
    _
  %s7 = ssub.s32 1, %s5
  %s8 = scalar_select 0, %s7, %s5
  // Predicated region
  $region2: #{gnn_forward.6} parent=0 // pred_check
    _
  $region3: #{gnn_forward.6} parent=0 // pred_check_branch
    %10 = sbr.rel (0) target = $region5
  $region4: #{gnn_forward.6} parent=0 // pred_region
    _
  $region5: #{gnn_forward.6} parent=0 // pred_fallthru
    _
  // Predicated region
  $region6: #{gnn_forward.6} parent=0 // pred_check
    _
  $region7: #{gnn_forward.6} parent=0 // pred_check_branch
    %12 = sbr.rel (0) target = $region9
  $region8: #{gnn_forward.6} parent=0 // pred_region
    _
  $region9: #{gnn_forward.6} parent=0 // pred_fallthru
    _
  // Predicated region
  $region10: #{gnn_forward.6} parent=0 // pred_check
    _
  $region11: #{gnn_forward.6} parent=0 // pred_check_branch
    %14 = sbr.rel (0) target = $region13
  $region12: #{gnn_forward.6} parent=0 // pred_region
    _
  $region13: #{gnn_forward.6} parent=0 // pred_fallthru
    _
  // Predicated region
  $region14: #{gnn_forward.6} parent=0 // pred_check
    _
  $region15: #{gnn_forward.6} parent=0 // pred_check_branch
    %16 = sbr.rel (0) target = $region17
  $region16: #{gnn_forward.6} parent=0 // pred_region
    _
  $region17: #{gnn_forward.6} parent=0 // pred_fallthru
    _
  %p18 = scmp.eq.s32.totalorder 0, 0
  // Predicated region
  $region18: #{gnn_forward.6} parent=0 // pred_check
    %p19 = pneg %p18
  $region19: #{gnn_forward.6} parent=0 // pred_check_branch
    %21 = sbr.rel (%p19) target = $region21
  $region20: #{gnn_forward.6} parent=0 // pred_region
    %22 = vst [vmem:[#allocation2] sm:$0xff] 0.0
    %23 = vst [vmem:[#allocation2 + $0x8] sm:$0xff] 0.0
    %24 = vst [vmem:[#allocation2 + $0x10] sm:$0xff] 0.0
    %25 = vst [vmem:[#allocation2 + $0x18] sm:$0xff] 0.0
    %26 = vst [vmem:[#allocation2 + $0x20] sm:$0xff] 0.0
    %27 = vst [vmem:[#allocation2 + $0x28] sm:$0xff] 0.0
    %28 = vst [vmem:[#allocation2 + $0x30] sm:$0xff] 0.0
    %29 = vst [vmem:[#allocation2 + $0x38] sm:$0xff] 0.0
    %30 = vst [vmem:[#allocation2 + $0x40] sm:$0xff] 0.0
    %31 = vst [vmem:[#allocation2 + $0x48] sm:$0xff] 0.0
    %32 = vst [vmem:[#allocation2 + $0x50] sm:$0xff] 0.0
    %33 = vst [vmem:[#allocation2 + $0x58] sm:$0xff] 0.0
    %34 = vst [vmem:[#allocation2 + $0x60] sm:$0xff] 0.0
    %35 = vst [vmem:[#allocation2 + $0x68] sm:$0xff] 0.0
    %36 = vst [vmem:[#allocation2 + $0x70] sm:$0xff] 0.0
    %37 = vst [vmem:[#allocation2 + $0x78] sm:$0xff] 0.0
  $region21: #{gnn_forward.6} parent=0 // pred_fallthru
    _
  %s38 = smul.u32 0, 128
  %s39 = sshra.s32 %s38, 3
  %s40 = sand.u32 %s38, 7
  %s41 = smul.addr %s39, 4
  %s42 = scalar_lea.vmem %s1, %s41
  %v43 = vld [vmem:[%s42] sm:$0xf]
  %v44 = vld [vmem:[%s42 + $0x4] sm:$0xf]
  %v45 = vld [vmem:[%s42 + $0x8] sm:$0xf]
  %v46 = vld [vmem:[%s42 + $0xc] sm:$0xf]
  %v47 = vld [vmem:[%s42 + $0x10] sm:$0xf]
  %v48 = vld [vmem:[%s42 + $0x14] sm:$0xf]
  %v49 = vld [vmem:[%s42 + $0x18] sm:$0xf]
  %v50 = vld [vmem:[%s42 + $0x1c] sm:$0xf]
  %v51 = vld [vmem:[%s42 + $0x20] sm:$0xf]
  %v52 = vld [vmem:[%s42 + $0x24] sm:$0xf]
  %v53 = vld [vmem:[%s42 + $0x28] sm:$0xf]
  %v54 = vld [vmem:[%s42 + $0x2c] sm:$0xf]
  %v55 = vld [vmem:[%s42 + $0x30] sm:$0xf]
  %v56 = vld [vmem:[%s42 + $0x34] sm:$0xf]
  %v57 = vld [vmem:[%s42 + $0x38] sm:$0xf]
  %v58 = vld [vmem:[%s42 + $0x3c] sm:$0xf]
  %v59 = vld [vmem:[#allocation2] sm:$0xff]
  %v60 = vld [vmem:[#allocation2 + $0x8] sm:$0xff]
  %v61 = vld [vmem:[#allocation2 + $0x10] sm:$0xff]
  %v62 = vld [vmem:[#allocation2 + $0x18] sm:$0xff]
  %v63 = vld [vmem:[#allocation2 + $0x20] sm:$0xff]
  %v64 = vld [vmem:[#allocation2 + $0x28] sm:$0xff]
  %v65 = vld [vmem:[#allocation2 + $0x30] sm:$0xff]
  %v66 = vld [vmem:[#allocation2 + $0x38] sm:$0xff]
  %v67 = vld [vmem:[#allocation2 + $0x40] sm:$0xff]
  %v68 = vld [vmem:[#allocation2 + $0x48] sm:$0xff]
  %v69 = vld [vmem:[#allocation2 + $0x50] sm:$0xff]
  %v70 = vld [vmem:[#allocation2 + $0x58] sm:$0xff]
  %v71 = vld [vmem:[#allocation2 + $0x60] sm:$0xff]
  %v72 = vld [vmem:[#allocation2 + $0x68] sm:$0xff]
  %v73 = vld [vmem:[#allocation2 + $0x70] sm:$0xff]
  %v74 = vld [vmem:[#allocation2 + $0x78] sm:$0xff]
  %v75 = vld [vmem:[%s0] sm:$0xff]
  %v76 = vld [vmem:[%s0 + $0x8] sm:$0xff]
  %v77 = vld [vmem:[%s0 + $0x10] sm:$0xff]
  %v78 = vld [vmem:[%s0 + $0x18] sm:$0xff]
  %v79 = vunpack.c.l.s8.bf16 %v75
  %v80 = vunpack.c.h.s8.bf16 %v75
  %v81 = vunpack.c.l.s8.bf16 %v76
  %v82 = vunpack.c.h.s8.bf16 %v76
  %v83 = vunpack.c.l.s8.bf16 %v77
  %v84 = vunpack.c.h.s8.bf16 %v77
  %v85 = vunpack.c.l.s8.bf16 %v78
  %v86 = vunpack.c.h.s8.bf16 %v78
  %v103 = vunpack.c.l.b16 %v43
  %v104 = vunpack.c.l.b16 %v44
  %v105 = vunpack.c.l.b16 %v45
  %v106 = vunpack.c.l.b16 %v46
  %v107 = vunpack.c.l.b16 %v47
  %v108 = vunpack.c.l.b16 %v48
  %v109 = vunpack.c.l.b16 %v49
  %v110 = vunpack.c.l.b16 %v50
  %v111 = vunpack.c.l.b16 %v51
  %v112 = vunpack.c.l.b16 %v52
  %v113 = vunpack.c.l.b16 %v53
  %v114 = vunpack.c.l.b16 %v54
  %v115 = vunpack.c.l.b16 %v55
  %v116 = vunpack.c.l.b16 %v56
  %v117 = vunpack.c.l.b16 %v57
  %v118 = vunpack.c.l.b16 %v58
  %v119 = vpack.c.b16 %v104, %v103
  %v120 = vpack.c.b16 %v106, %v105
  %v121 = vpack.c.b16 %v108, %v107
  %v122 = vpack.c.b16 %v110, %v109
  %v123 = vpack.c.b16 %v112, %v111
  %v124 = vpack.c.b16 %v114, %v113
  %v125 = vpack.c.b16 %v116, %v115
  %v126 = vpack.c.b16 %v118, %v117
  %135 = vmatprep.subr.bf16.mxu0 0
  %136 = vmatpush1.bf16.msra.mxu0 %v119
  %137 = vmatprep.subr.bf16.mxu0 0
  %138 = vmatpush1.bf16.msra.mxu0 %v120
  %139 = vmatprep.subr.bf16.mxu0 0
  %140 = vmatpush1.bf16.msra.mxu0 %v121
  %141 = vmatprep.subr.bf16.mxu0 0
  %142 = vmatpush1.bf16.msra.mxu0 %v122
  %143 = vmatprep.subr.bf16.mxu0 0
  %144 = vmatpush1.bf16.msra.mxu0 %v123
  %145 = vmatprep.subr.bf16.mxu0 0
  %146 = vmatpush1.bf16.msra.mxu0 %v124
  %147 = vmatprep.subr.bf16.mxu0 0
  %148 = vmatpush1.bf16.msra.mxu0 %v125
  %149 = vmatprep.subr.bf16.mxu0 0
  %150 = vmatpush1.bf16.msra.mxu0 %v126
  %151 = vmatprep.subr.bf16.mxu0 0
  %152 = vmatpush1.bf16.msra.mxu0 0
  %153 = vmatprep.subr.bf16.mxu0 0
  %154 = vmatpush1.bf16.msra.mxu0 0
  %155 = vmatprep.subr.bf16.mxu0 0
  %156 = vmatpush1.bf16.msra.mxu0 0
  %157 = vmatprep.subr.bf16.mxu0 0
  %158 = vmatpush1.bf16.msra.mxu0 0
  %159 = vmatprep.subr.bf16.mxu0 0
  %160 = vmatpush1.bf16.msra.mxu0 0
  %161 = vmatprep.subr.bf16.mxu0 0
  %162 = vmatpush1.bf16.msra.mxu0 0
  %163 = vmatprep.subr.bf16.mxu0 0
  %164 = vmatpush1.bf16.msra.mxu0 0
  %165 = vmatprep.subr.bf16.mxu0 0
  %166 = vmatpush1.bf16.msra.mxu0 0
  %167 = vmatprep.mubr.bf16.mxu0 0
  %168 = vmatmul.mubr.bf16.gmra.mrb[0].mxu0 %v79
  %v169 = vpop.f32.mrb[0].mxu0
  %v170 = vadd.f32 0.0, %v169
  %v171 = vpop.f32.mrb[0].mxu0
  %v172 = vpop.f32.mrb[0].mxu0
  %v173 = vadd.f32 0.0, %v172
  %v174 = vpop.f32.mrb[0].mxu0
  %175 = vmatprep.mubr.bf16.mxu0 0
  %176 = vmatmul.mubr.bf16.gmra.mrb[0].mxu0 %v80
  %v177 = vpop.f32.mrb[0].mxu0
  %v178 = vadd.f32 0.0, %v177
  %v179 = vpop.f32.mrb[0].mxu0
  %v180 = vpop.f32.mrb[0].mxu0
  %v181 = vadd.f32 0.0, %v180
  %v182 = vpop.f32.mrb[0].mxu0
  %183 = vmatprep.mubr.bf16.mxu0 0
  %184 = vmatmul.mubr.bf16.gmra.mrb[0].mxu0 %v81
  %v185 = vpop.f32.mrb[0].mxu0
  %v186 = vadd.f32 0.0, %v185
  %v187 = vpop.f32.mrb[0].mxu0
  %v188 = vpop.f32.mrb[0].mxu0
  %v189 = vadd.f32 0.0, %v188
  %v190 = vpop.f32.mrb[0].mxu0
  %191 = vmatprep.mubr.bf16.mxu0 0
  %192 = vmatmul.mubr.bf16.gmra.mrb[0].mxu0 %v82
  %v193 = vpop.f32.mrb[0].mxu0
  %v194 = vadd.f32 0.0, %v193
  %v195 = vpop.f32.mrb[0].mxu0
  %v196 = vpop.f32.mrb[0].mxu0
  %v197 = vadd.f32 0.0, %v196
  %v198 = vpop.f32.mrb[0].mxu0
  %199 = vmatprep.mubr.bf16.mxu0 0
  %200 = vmatmul.mubr.bf16.gmra.mrb[0].mxu0 %v83
  %v201 = vpop.f32.mrb[0].mxu0
  %v202 = vadd.f32 0.0, %v201
  %v203 = vpop.f32.mrb[0].mxu0
  %v204 = vpop.f32.mrb[0].mxu0
  %v205 = vadd.f32 0.0, %v204
  %v206 = vpop.f32.mrb[0].mxu0
  %207 = vmatprep.mubr.bf16.mxu0 0
  %208 = vmatmul.mubr.bf16.gmra.mrb[0].mxu0 %v84
  %v209 = vpop.f32.mrb[0].mxu0
  %v210 = vadd.f32 0.0, %v209
  %v211 = vpop.f32.mrb[0].mxu0
  %v212 = vpop.f32.mrb[0].mxu0
  %v213 = vadd.f32 0.0, %v212
  %v214 = vpop.f32.mrb[0].mxu0
  %215 = vmatprep.mubr.bf16.mxu0 0
  %216 = vmatmul.mubr.bf16.gmra.mrb[0].mxu0 %v85
  %v217 = vpop.f32.mrb[0].mxu0
  %v218 = vadd.f32 0.0, %v217
  %v219 = vpop.f32.mrb[0].mxu0
  %v220 = vpop.f32.mrb[0].mxu0
  %v221 = vadd.f32 0.0, %v220
  %v222 = vpop.f32.mrb[0].mxu0
  %223 = vmatprep.mubr.bf16.mxu0 0
  %224 = vmatmul.mubr.bf16.gmra.mrb[0].mxu0 %v86
  %v225 = vpop.f32.mrb[0].mxu0
  %v226 = vadd.f32 0.0, %v225
  %v227 = vpop.f32.mrb[0].mxu0
  %v228 = vpop.f32.mrb[0].mxu0
  %v229 = vadd.f32 0.0, %v228
  %v230 = vpop.f32.mrb[0].mxu0
  %231 = vdwg.mxu0
  %v232 = vadd.f32 %v59, %v170
  %v233 = vadd.f32 %v60, %v173
  %v234 = vadd.f32 %v61, %v178
  %v235 = vadd.f32 %v62, %v181
  %v236 = vadd.f32 %v63, %v186
  %v237 = vadd.f32 %v64, %v189
  %v238 = vadd.f32 %v65, %v194
  %v239 = vadd.f32 %v66, %v197
  %v240 = vadd.f32 %v67, %v202
  %v241 = vadd.f32 %v68, %v205
  %v242 = vadd.f32 %v69, %v210
  %v243 = vadd.f32 %v70, %v213
  %v244 = vadd.f32 %v71, %v218
  %v245 = vadd.f32 %v72, %v221
  %v246 = vadd.f32 %v73, %v226
  %v247 = vadd.f32 %v74, %v229
  %248 = vst [vmem:[#allocation2] sm:$0xff] %v232
  %249 = vst [vmem:[#allocation2 + $0x8] sm:$0xff] %v233
  %250 = vst [vmem:[#allocation2 + $0x10] sm:$0xff] %v234
  %251 = vst [vmem:[#allocation2 + $0x18] sm:$0xff] %v235
  %252 = vst [vmem:[#allocation2 + $0x20] sm:$0xff] %v236
  %253 = vst [vmem:[#allocation2 + $0x28] sm:$0xff] %v237
  %254 = vst [vmem:[#allocation2 + $0x30] sm:$0xff] %v238
  %255 = vst [vmem:[#allocation2 + $0x38] sm:$0xff] %v239
  %256 = vst [vmem:[#allocation2 + $0x40] sm:$0xff] %v240
  %257 = vst [vmem:[#allocation2 + $0x48] sm:$0xff] %v241
  %258 = vst [vmem:[#allocation2 + $0x50] sm:$0xff] %v242
  %259 = vst [vmem:[#allocation2 + $0x58] sm:$0xff] %v243
  %260 = vst [vmem:[#allocation2 + $0x60] sm:$0xff] %v244
  %261 = vst [vmem:[#allocation2 + $0x68] sm:$0xff] %v245
  %262 = vst [vmem:[#allocation2 + $0x70] sm:$0xff] %v246
  %263 = vst [vmem:[#allocation2 + $0x78] sm:$0xff] %v247
  // Predicated region
  $region22: #{gnn_forward.6} parent=0 // pred_check
    %p264 = pneg %p18
  $region23: #{gnn_forward.6} parent=0 // pred_check_branch
    %266 = sbr.rel (%p264) target = $region25
  $region24: #{gnn_forward.6} parent=0 // pred_region
    %v267 = vld [vmem:[%s2] sm:$0xff]
    %v268 = vld [vmem:[%s2 + $0x8] sm:$0xff]
    %v269 = vld [vmem:[%s2 + $0x10] sm:$0xff]
    %v270 = vld [vmem:[%s2 + $0x18] sm:$0xff]
    %v271 = vld [vmem:[%s2 + $0x20] sm:$0xff]
    %v272 = vld [vmem:[%s2 + $0x28] sm:$0xff]
    %v273 = vld [vmem:[%s2 + $0x30] sm:$0xff]
    %v274 = vld [vmem:[%s2 + $0x38] sm:$0xff]
    %v275 = vld [vmem:[%s2 + $0x40] sm:$0xff]
    %v276 = vld [vmem:[%s2 + $0x48] sm:$0xff]
    %v277 = vld [vmem:[%s2 + $0x50] sm:$0xff]
    %v278 = vld [vmem:[%s2 + $0x58] sm:$0xff]
    %v279 = vld [vmem:[%s2 + $0x60] sm:$0xff]
    %v280 = vld [vmem:[%s2 + $0x68] sm:$0xff]
    %v281 = vld [vmem:[%s2 + $0x70] sm:$0xff]
    %v282 = vld [vmem:[%s2 + $0x78] sm:$0xff]
    %v283 = vld [vmem:[#allocation2] sm:$0xff]
    %v284 = vld [vmem:[#allocation2 + $0x8] sm:$0xff]
    %v285 = vld [vmem:[#allocation2 + $0x10] sm:$0xff]
    %v286 = vld [vmem:[#allocation2 + $0x18] sm:$0xff]
    %v287 = vld [vmem:[#allocation2 + $0x20] sm:$0xff]
    %v288 = vld [vmem:[#allocation2 + $0x28] sm:$0xff]
    %v289 = vld [vmem:[#allocation2 + $0x30] sm:$0xff]
    %v290 = vld [vmem:[#allocation2 + $0x38] sm:$0xff]
    %v291 = vld [vmem:[#allocation2 + $0x40] sm:$0xff]
    %v292 = vld [vmem:[#allocation2 + $0x48] sm:$0xff]
    %v293 = vld [vmem:[#allocation2 + $0x50] sm:$0xff]
    %v294 = vld [vmem:[#allocation2 + $0x58] sm:$0xff]
    %v295 = vld [vmem:[#allocation2 + $0x60] sm:$0xff]
    %v296 = vld [vmem:[#allocation2 + $0x68] sm:$0xff]
    %v297 = vld [vmem:[#allocation2 + $0x70] sm:$0xff]
    %v298 = vld [vmem:[#allocation2 + $0x78] sm:$0xff]
    %300 = vset.pattern.permute.xlu0 0
    %301 = vperm.xlu0 %300, %v267
    %v302 = vpop.permute.xlu0 %301
    %305 = vset.pattern.permute.xlu0 0
    %306 = vperm.xlu0 %305, %v268
    %v307 = vpop.permute.xlu0 %306
    %310 = vset.pattern.permute.xlu0 0
    %311 = vperm.xlu0 %310, %v269
    %v312 = vpop.permute.xlu0 %311
    %315 = vset.pattern.permute.xlu0 0
    %316 = vperm.xlu0 %315, %v270
    %v317 = vpop.permute.xlu0 %316
    %320 = vset.pattern.permute.xlu0 0
    %321 = vperm.xlu0 %320, %v271
    %v322 = vpop.permute.xlu0 %321
    %325 = vset.pattern.permute.xlu0 0
    %326 = vperm.xlu0 %325, %v272
    %v327 = vpop.permute.xlu0 %326
    %330 = vset.pattern.permute.xlu0 0
    %331 = vperm.xlu0 %330, %v273
    %v332 = vpop.permute.xlu0 %331
    %335 = vset.pattern.permute.xlu0 0
    %336 = vperm.xlu0 %335, %v274
    %v337 = vpop.permute.xlu0 %336
    %340 = vset.pattern.permute.xlu0 0
    %341 = vperm.xlu0 %340, %v275
    %v342 = vpop.permute.xlu0 %341
    %345 = vset.pattern.permute.xlu0 0
    %346 = vperm.xlu0 %345, %v276
    %v347 = vpop.permute.xlu0 %346
    %350 = vset.pattern.permute.xlu0 0
    %351 = vperm.xlu0 %350, %v277
    %v352 = vpop.permute.xlu0 %351
    %355 = vset.pattern.permute.xlu0 0
    %356 = vperm.xlu0 %355, %v278
    %v357 = vpop.permute.xlu0 %356
    %360 = vset.pattern.permute.xlu0 0
    %361 = vperm.xlu0 %360, %v279
    %v362 = vpop.permute.xlu0 %361
    %365 = vset.pattern.permute.xlu0 0
    %366 = vperm.xlu0 %365, %v280
    %v367 = vpop.permute.xlu0 %366
    %370 = vset.pattern.permute.xlu0 0
    %371 = vperm.xlu0 %370, %v281
    %v372 = vpop.permute.xlu0 %371
    %375 = vset.pattern.permute.xlu0 0
    %376 = vperm.xlu0 %375, %v282
    %v377 = vpop.permute.xlu0 %376
    %v379 = vmul.f32 %v302, %v283
    %v380 = vmul.f32 %v307, %v284
    %v381 = vmul.f32 %v312, %v285
    %v382 = vmul.f32 %v317, %v286
    %v383 = vmul.f32 %v322, %v287
    %v384 = vmul.f32 %v327, %v288
    %v385 = vmul.f32 %v332, %v289
    %v386 = vmul.f32 %v337, %v290
    %v387 = vmul.f32 %v342, %v291
    %v388 = vmul.f32 %v347, %v292
    %v389 = vmul.f32 %v352, %v293
    %v390 = vmul.f32 %v357, %v294
    %v391 = vmul.f32 %v362, %v295
    %v392 = vmul.f32 %v367, %v296
    %v393 = vmul.f32 %v372, %v297
    %v394 = vmul.f32 %v377, %v298
    %v395 = vld [vmem:[%s3] sm:$0x1]
    %v397 = vlaneseq
    %v398 = vshrl.u32 %v397, 7
    %v399 = vsub.s32 0, %v398
    %v400 = vrot.slane %v395, %v399
    %v402 = vadd.f32 %v379, %v400
    %v403 = vadd.f32 %v380, %v400
    %v404 = vadd.f32 %v381, %v400
    %v405 = vadd.f32 %v382, %v400
    %v406 = vadd.f32 %v383, %v400
    %v407 = vadd.f32 %v384, %v400
    %v408 = vadd.f32 %v385, %v400
    %v409 = vadd.f32 %v386, %v400
    %v410 = vadd.f32 %v387, %v400
    %v411 = vadd.f32 %v388, %v400
    %v412 = vadd.f32 %v389, %v400
    %v413 = vadd.f32 %v390, %v400
    %v414 = vadd.f32 %v391, %v400
    %v415 = vadd.f32 %v392, %v400
    %v416 = vadd.f32 %v393, %v400
    %v417 = vadd.f32 %v394, %v400
    %v418 = vmax.f32 %v402, 0.0
    %v419 = vmax.f32 %v403, 0.0
    %v420 = vmax.f32 %v404, 0.0
    %v421 = vmax.f32 %v405, 0.0
    %v422 = vmax.f32 %v406, 0.0
    %v423 = vmax.f32 %v407, 0.0
    %v424 = vmax.f32 %v408, 0.0
    %v425 = vmax.f32 %v409, 0.0
    %v426 = vmax.f32 %v410, 0.0
    %v427 = vmax.f32 %v411, 0.0
    %v428 = vmax.f32 %v412, 0.0
    %v429 = vmax.f32 %v413, 0.0
    %v430 = vmax.f32 %v414, 0.0
    %v431 = vmax.f32 %v415, 0.0
    %v432 = vmax.f32 %v416, 0.0
    %v433 = vmax.f32 %v417, 0.0
    %v434 = vpack.c.bf16 %v419, %v418
    %v435 = vpack.c.bf16 %v421, %v420
    %v436 = vpack.c.bf16 %v423, %v422
    %v437 = vpack.c.bf16 %v425, %v424
    %v438 = vpack.c.bf16 %v427, %v426
    %v439 = vpack.c.bf16 %v429, %v428
    %v440 = vpack.c.bf16 %v431, %v430
    %v441 = vpack.c.bf16 %v433, %v432
    %v450 = vunpack.c.l.b16 %v434
    %v451 = vunpack.c.h.b16 %v434
    %v452 = vunpack.c.l.b16 %v435
    %v453 = vunpack.c.h.b16 %v435
    %v454 = vunpack.c.l.b16 %v436
    %v455 = vunpack.c.h.b16 %v436
    %v456 = vunpack.c.l.b16 %v437
    %v457 = vunpack.c.h.b16 %v437
    %v458 = vunpack.c.l.b16 %v438
    %v459 = vunpack.c.h.b16 %v438
    %v460 = vunpack.c.l.b16 %v439
    %v461 = vunpack.c.h.b16 %v439
    %v462 = vunpack.c.l.b16 %v440
    %v463 = vunpack.c.h.b16 %v440
    %v464 = vunpack.c.l.b16 %v441
    %v465 = vunpack.c.h.b16 %v441
    %v466 = vpack.c.b16 %v450, %v450
    %v467 = vpack.c.b16 %v451, %v451
    %v468 = vpack.c.b16 %v452, %v452
    %v469 = vpack.c.b16 %v453, %v453
    %v470 = vpack.c.b16 %v454, %v454
    %v471 = vpack.c.b16 %v455, %v455
    %v472 = vpack.c.b16 %v456, %v456
    %v473 = vpack.c.b16 %v457, %v457
    %v474 = vpack.c.b16 %v458, %v458
    %v475 = vpack.c.b16 %v459, %v459
    %v476 = vpack.c.b16 %v460, %v460
    %v477 = vpack.c.b16 %v461, %v461
    %v478 = vpack.c.b16 %v462, %v462
    %v479 = vpack.c.b16 %v463, %v463
    %v480 = vpack.c.b16 %v464, %v464
    %v481 = vpack.c.b16 %v465, %v465
    %498 = vst [vmem:[%s4] sm:$0xf] %v466
    %499 = vst [vmem:[%s4 + $0x4] sm:$0xf] %v467
    %500 = vst [vmem:[%s4 + $0x8] sm:$0xf] %v468
    %501 = vst [vmem:[%s4 + $0xc] sm:$0xf] %v469
    %502 = vst [vmem:[%s4 + $0x10] sm:$0xf] %v470
    %503 = vst [vmem:[%s4 + $0x14] sm:$0xf] %v471
    %504 = vst [vmem:[%s4 + $0x18] sm:$0xf] %v472
    %505 = vst [vmem:[%s4 + $0x1c] sm:$0xf] %v473
    %506 = vst [vmem:[%s4 + $0x20] sm:$0xf] %v474
    %507 = vst [vmem:[%s4 + $0x24] sm:$0xf] %v475
    %508 = vst [vmem:[%s4 + $0x28] sm:$0xf] %v476
    %509 = vst [vmem:[%s4 + $0x2c] sm:$0xf] %v477
    %510 = vst [vmem:[%s4 + $0x30] sm:$0xf] %v478
    %511 = vst [vmem:[%s4 + $0x34] sm:$0xf] %v479
    %512 = vst [vmem:[%s4 + $0x38] sm:$0xf] %v480
    %513 = vst [vmem:[%s4 + $0x3c] sm:$0xf] %v481
  $region25: #{gnn_forward.6} parent=0 // pred_fallthru
    _
  // Predicated region
  $region26: #{gnn_forward.6} parent=0 // pred_check
    _
  $region27: #{gnn_forward.6} parent=0 // pred_check_branch
    %515 = sbr.rel (0) target = $region29
  $region28: #{gnn_forward.6} parent=0 // pred_region
    _
  $region29: #{gnn_forward.6} parent=0 // pred_fallthru
    _
  // Predicated region
  $region30: #{gnn_forward.6} parent=0 // pred_check
    _
  $region31: #{gnn_forward.6} parent=0 // pred_check_branch
    %517 = sbr.rel (0) target = $region33
  $region32: #{gnn_forward.6} parent=0 // pred_region
    _
  $region33: #{gnn_forward.6} parent=0 // pred_fallthru
    _

// kernel: gnn_forward.9
$region0: #{gnn_forward.9}
  #allocation0 [shape = 'u32[]', space=smem, size = 0x4, offset = 0x4, fixed_abs, tag = 'smem constant byte address 0x4 - core index']
  #allocation1 [shape = 'u32[144,128]{1,0:T(1,128)}', space=vmem, size = 0x12000, scoped, tag = 'internal scratch']
  #allocation2 [shape = 'f32[8,128]{1,0:T(8,128)}', space=vmem, size = 0x1000, scoped, tag = 'scratch operand']
  %s0 = inlined_call_operand.vmem [shape: bf16[8,128], index: 0, kind: input, shape index: {}]
  %s1 = inlined_call_operand.vmem [shape: bf16[128,128], index: 1, kind: input, shape index: {}]
  %s2 = inlined_call_operand.vmem [shape: f32[8,1], index: 2, kind: input, shape index: {}]
  %s3 = inlined_call_operand.vmem [shape: f32[128,128], index: 3, kind: input, shape index: {}]
  %s4 = inlined_call_operand.vmem [shape: f32[1,128], index: 4, kind: input, shape index: {}]
  %s5 = inlined_call_operand.vmem [shape: f32[8,128], index: 5, kind: output, shape index: {}]
  %s6 = sld [smem:[#allocation0]]
  $region38: #{gnn_forward.9} parent=0
    _
  %s8 = ssub.s32 1, %s6
  %s9 = scalar_select 0, %s8, %s6
  // Predicated region
  $region2: #{gnn_forward.9} parent=0 // pred_check
    _
  $region3: #{gnn_forward.9} parent=0 // pred_check_branch
    %11 = sbr.rel (0) target = $region5
  $region4: #{gnn_forward.9} parent=0 // pred_region
    _
  $region5: #{gnn_forward.9} parent=0 // pred_fallthru
    _
  // Predicated region
  $region6: #{gnn_forward.9} parent=0 // pred_check
    _
  $region7: #{gnn_forward.9} parent=0 // pred_check_branch
    %13 = sbr.rel (0) target = $region9
  $region8: #{gnn_forward.9} parent=0 // pred_region
    _
  $region9: #{gnn_forward.9} parent=0 // pred_fallthru
    _
  // Predicated region
  $region10: #{gnn_forward.9} parent=0 // pred_check
    _
  $region11: #{gnn_forward.9} parent=0 // pred_check_branch
    %15 = sbr.rel (0) target = $region13
  $region12: #{gnn_forward.9} parent=0 // pred_region
    _
  $region13: #{gnn_forward.9} parent=0 // pred_fallthru
    _
  // Predicated region
  $region14: #{gnn_forward.9} parent=0 // pred_check
    _
  $region15: #{gnn_forward.9} parent=0 // pred_check_branch
    %17 = sbr.rel (0) target = $region17
  $region16: #{gnn_forward.9} parent=0 // pred_region
    _
  $region17: #{gnn_forward.9} parent=0 // pred_fallthru
    _
  // Predicated region
  $region18: #{gnn_forward.9} parent=0 // pred_check
    _
  $region19: #{gnn_forward.9} parent=0 // pred_check_branch
    %19 = sbr.rel (0) target = $region21
  $region20: #{gnn_forward.9} parent=0 // pred_region
    _
  $region21: #{gnn_forward.9} parent=0 // pred_fallthru
    _
  %p21 = scmp.eq.s32.totalorder 0, 0
  // Predicated region
  $region22: #{gnn_forward.9} parent=0 // pred_check
    %p22 = pneg %p21
  $region23: #{gnn_forward.9} parent=0 // pred_check_branch
    %24 = sbr.rel (%p22) target = $region25
  $region24: #{gnn_forward.9} parent=0 // pred_region
    %25 = vst [vmem:[#allocation2] sm:$0xff] 0.0
  $region25: #{gnn_forward.9} parent=0 // pred_fallthru
    _
  %v26 = vld [vmem:[#allocation2] sm:$0xff]
  %v27 = vld [vmem:[%s0] sm:$0xf]
  %v28 = vld [vmem:[%s1] sm:$0xf]
  %v29 = vld [vmem:[%s1 + $0x4] sm:$0xf]
  %v30 = vld [vmem:[%s1 + $0x8] sm:$0xf]
  %v31 = vld [vmem:[%s1 + $0xc] sm:$0xf]
  %v32 = vld [vmem:[%s1 + $0x10] sm:$0xf]
  %v33 = vld [vmem:[%s1 + $0x14] sm:$0xf]
  %v34 = vld [vmem:[%s1 + $0x18] sm:$0xf]
  %v35 = vld [vmem:[%s1 + $0x1c] sm:$0xf]
  %v36 = vld [vmem:[%s1 + $0x20] sm:$0xf]
  %v37 = vld [vmem:[%s1 + $0x24] sm:$0xf]
  %v38 = vld [vmem:[%s1 + $0x28] sm:$0xf]
  %v39 = vld [vmem:[%s1 + $0x2c] sm:$0xf]
  %v40 = vld [vmem:[%s1 + $0x30] sm:$0xf]
  %v41 = vld [vmem:[%s1 + $0x34] sm:$0xf]
  %v42 = vld [vmem:[%s1 + $0x38] sm:$0xf]
  %v43 = vld [vmem:[%s1 + $0x3c] sm:$0xf]
  %v60 = vunpack.c.l.b16 %v28
  %v61 = vunpack.c.l.b16 %v29
  %v62 = vunpack.c.l.b16 %v30
  %v63 = vunpack.c.l.b16 %v31
  %v64 = vunpack.c.l.b16 %v32
  %v65 = vunpack.c.l.b16 %v33
  %v66 = vunpack.c.l.b16 %v34
  %v67 = vunpack.c.l.b16 %v35
  %v68 = vunpack.c.l.b16 %v36
  %v69 = vunpack.c.l.b16 %v37
  %v70 = vunpack.c.l.b16 %v38
  %v71 = vunpack.c.l.b16 %v39
  %v72 = vunpack.c.l.b16 %v40
  %v73 = vunpack.c.l.b16 %v41
  %v74 = vunpack.c.l.b16 %v42
  %v75 = vunpack.c.l.b16 %v43
  %v76 = vpack.c.b16 %v61, %v60
  %v77 = vpack.c.b16 %v63, %v62
  %v78 = vpack.c.b16 %v65, %v64
  %v79 = vpack.c.b16 %v67, %v66
  %v80 = vpack.c.b16 %v69, %v68
  %v81 = vpack.c.b16 %v71, %v70
  %v82 = vpack.c.b16 %v73, %v72
  %v83 = vpack.c.b16 %v75, %v74
  %92 = vmatprep.subr.bf16.mxu0 0
  %93 = vmatpush1.bf16.msra.mxu0 %v76
  %94 = vmatprep.subr.bf16.mxu0 0
  %95 = vmatpush1.bf16.msra.mxu0 %v77
  %96 = vmatprep.subr.bf16.mxu0 0
  %97 = vmatpush1.bf16.msra.mxu0 %v78
  %98 = vmatprep.subr.bf16.mxu0 0
  %99 = vmatpush1.bf16.msra.mxu0 %v79
  %100 = vmatprep.subr.bf16.mxu0 0
  %101 = vmatpush1.bf16.msra.mxu0 %v80
  %102 = vmatprep.subr.bf16.mxu0 0
  %103 = vmatpush1.bf16.msra.mxu0 %v81
  %104 = vmatprep.subr.bf16.mxu0 0
  %105 = vmatpush1.bf16.msra.mxu0 %v82
  %106 = vmatprep.subr.bf16.mxu0 0
  %107 = vmatpush1.bf16.msra.mxu0 %v83
  %108 = vmatprep.subr.bf16.mxu0 0
  %109 = vmatpush1.bf16.msra.mxu0 0
  %110 = vmatprep.subr.bf16.mxu0 0
  %111 = vmatpush1.bf16.msra.mxu0 0
  %112 = vmatprep.subr.bf16.mxu0 0
  %113 = vmatpush1.bf16.msra.mxu0 0
  %114 = vmatprep.subr.bf16.mxu0 0
  %115 = vmatpush1.bf16.msra.mxu0 0
  %116 = vmatprep.subr.bf16.mxu0 0
  %117 = vmatpush1.bf16.msra.mxu0 0
  %118 = vmatprep.subr.bf16.mxu0 0
  %119 = vmatpush1.bf16.msra.mxu0 0
  %120 = vmatprep.subr.bf16.mxu0 0
  %121 = vmatpush1.bf16.msra.mxu0 0
  %122 = vmatprep.subr.bf16.mxu0 0
  %123 = vmatpush1.bf16.msra.mxu0 0
  %124 = vmatprep.mubr.bf16.mxu0 0
  %125 = vmatmul.mubr.bf16.gmra.mrb[0].mxu0 %v27
  %v126 = vpop.f32.mrb[0].mxu0
  %v127 = vadd.f32 0.0, %v126
  %v128 = vpop.f32.mrb[0].mxu0
  %v129 = vpop.f32.mrb[0].mxu0
  %v130 = vpop.f32.mrb[0].mxu0
  %131 = vdwg.mxu0
  %v132 = vadd.f32 %v26, %v127
  %133 = vst [vmem:[#allocation2] sm:$0xff] %v132
  // Predicated region
  $region26: #{gnn_forward.9} parent=0 // pred_check
    %p134 = pneg %p21
  $region27: #{gnn_forward.9} parent=0 // pred_check_branch
    %136 = sbr.rel (%p134) target = $region29
  $region28: #{gnn_forward.9} parent=0 // pred_region
    %v137 = vld [vmem:[%s2] sm:$0xff]
    %v138 = vld [vmem:[#allocation2] sm:$0xff]
    %140 = vset.pattern.permute.xlu0 0
    %141 = vperm.xlu0 %140, %v137
    %v142 = vpop.permute.xlu0 %141
    %v144 = vmul.f32 %v142, %v138
    %v145 = vld [vmem:[%s3] sm:$0xff]
    %v146 = vld [vmem:[%s3 + $0x8] sm:$0xff]
    %v147 = vld [vmem:[%s3 + $0x10] sm:$0xff]
    %v148 = vld [vmem:[%s3 + $0x18] sm:$0xff]
    %v149 = vld [vmem:[%s3 + $0x20] sm:$0xff]
    %v150 = vld [vmem:[%s3 + $0x28] sm:$0xff]
    %v151 = vld [vmem:[%s3 + $0x30] sm:$0xff]
    %v152 = vld [vmem:[%s3 + $0x38] sm:$0xff]
    %v153 = vld [vmem:[%s3 + $0x40] sm:$0xff]
    %v154 = vld [vmem:[%s3 + $0x48] sm:$0xff]
    %v155 = vld [vmem:[%s3 + $0x50] sm:$0xff]
    %v156 = vld [vmem:[%s3 + $0x58] sm:$0xff]
    %v157 = vld [vmem:[%s3 + $0x60] sm:$0xff]
    %v158 = vld [vmem:[%s3 + $0x68] sm:$0xff]
    %v159 = vld [vmem:[%s3 + $0x70] sm:$0xff]
    %v160 = vld [vmem:[%s3 + $0x78] sm:$0xff]
    %v161 = vld [vmem:[%s4] sm:$0x1]
    %v163 = vlaneseq
    %v164 = vshrl.u32 %v163, 7
    %v165 = vsub.s32 0, %v164
    %v166 = vrot.slane %v161, %v165
    %168 = vmatprep.subr.mxu0 0.0
    %169 = vmatpush1.msra.mxu0 %v145
    %170 = vmatprep.subr.mxu0 0.0
    %171 = vmatpush1.msra.mxu0 %v146
    %172 = vmatprep.subr.mxu0 0.0
    %173 = vmatpush1.msra.mxu0 %v147
    %174 = vmatprep.subr.mxu0 0.0
    %175 = vmatpush1.msra.mxu0 %v148
    %176 = vmatprep.subr.mxu0 0.0
    %177 = vmatpush1.msra.mxu0 %v149
    %178 = vmatprep.subr.mxu0 0.0
    %179 = vmatpush1.msra.mxu0 %v150
    %180 = vmatprep.subr.mxu0 0.0
    %181 = vmatpush1.msra.mxu0 %v151
    %182 = vmatprep.subr.mxu0 0.0
    %183 = vmatpush1.msra.mxu0 %v152
    %184 = vmatprep.subr.mxu0 0.0
    %185 = vmatpush1.msra.mxu0 %v153
    %186 = vmatprep.subr.mxu0 0.0
    %187 = vmatpush1.msra.mxu0 %v154
    %188 = vmatprep.subr.mxu0 0.0
    %189 = vmatpush1.msra.mxu0 %v155
    %190 = vmatprep.subr.mxu0 0.0
    %191 = vmatpush1.msra.mxu0 %v156
    %192 = vmatprep.subr.mxu0 0.0
    %193 = vmatpush1.msra.mxu0 %v157
    %194 = vmatprep.subr.mxu0 0.0
    %195 = vmatpush1.msra.mxu0 %v158
    %196 = vmatprep.subr.mxu0 0.0
    %197 = vmatpush1.msra.mxu0 %v159
    %198 = vmatprep.subr.mxu0 0.0
    %199 = vmatpush1.msra.mxu0 %v160
    %200 = vmatprep.subr.mxu0 0.0
    %201 = vmatpush1.msra.mxu0 0.0
    %202 = vmatprep.subr.mxu0 0.0
    %203 = vmatpush1.msra.mxu0 0.0
    %204 = vmatprep.subr.mxu0 0.0
    %205 = vmatpush1.msra.mxu0 0.0
    %206 = vmatprep.subr.mxu0 0.0
    %207 = vmatpush1.msra.mxu0 0.0
    %208 = vmatprep.subr.mxu0 0.0
    %209 = vmatpush1.msra.mxu0 0.0
    %210 = vmatprep.subr.mxu0 0.0
    %211 = vmatpush1.msra.mxu0 0.0
    %212 = vmatprep.subr.mxu0 0.0
    %213 = vmatpush1.msra.mxu0 0.0
    %214 = vmatprep.subr.mxu0 0.0
    %215 = vmatpush1.msra.mxu0 0.0
    %216 = vmatprep.subr.mxu0 0.0
    %217 = vmatpush1.msra.mxu0 0.0
    %218 = vmatprep.subr.mxu0 0.0
    %219 = vmatpush1.msra.mxu0 0.0
    %220 = vmatprep.subr.mxu0 0.0
    %221 = vmatpush1.msra.mxu0 0.0
    %222 = vmatprep.subr.mxu0 0.0
    %223 = vmatpush1.msra.mxu0 0.0
    %224 = vmatprep.subr.mxu0 0.0
    %225 = vmatpush1.msra.mxu0 0.0
    %226 = vmatprep.subr.mxu0 0.0
    %227 = vmatpush1.msra.mxu0 0.0
    %228 = vmatprep.subr.mxu0 0.0
    %229 = vmatpush1.msra.mxu0 0.0
    %230 = vmatprep.subr.mxu0 0.0
    %231 = vmatpush1.msra.mxu0 0.0
    %232 = vmatprep.mubr.f32.mxu0 0.0
    %233 = vmatmul.mubr.f32.gmra.mrb[0].mxu0 %v144
    %v234 = vpop.f32.mrb[0].mxu0
    %v235 = vadd.f32 %v166, %v234
    %v236 = vpop.f32.mrb[0].mxu0
    %237 = vdwg.mxu0
    %v238 = vlaneseq
    %v239 = vand.u32 %v238, 127
    %vm240 = vcmp.lt.s32.totalorder %v239, 4
    %v241 = vsel %vm240, %v235, -1e+30
    %242 = vmax.xlane.f32.xlu0 %v241
    %v243 = vpop.xlane.xlu0 %242
    %v244 = vsub.f32 %v241, %v243
    %v245 = vmul.f32 %v244, 1.442695
    %v246 = vpow.pop %v245
    %247 = vadd.xlane.f32.xlu0 %v246
    %v248 = vpop.xlane.xlu0 %247
    %v249 = vlog2.pop %v248
    %v250 = vmul.f32 %v249, 0.6931472
    %v251 = vsub.f32 %v244, %v250
    %252 = vst [vmem:[%s5] sm:$0xff] %v251
  $region29: #{gnn_forward.9} parent=0 // pred_fallthru
    _
  // Predicated region
  $region30: #{gnn_forward.9} parent=0 // pred_check
    _
  $region31: #{gnn_forward.9} parent=0 // pred_check_branch
    %254 = sbr.rel (0) target = $region33
  $region32: #{gnn_forward.9} parent=0 // pred_region
    _
  $region33: #{gnn_forward.9} parent=0 // pred_fallthru
    _
  // Predicated region
  $region34: #{gnn_forward.9} parent=0 // pred_check
    _
  $region35: #{gnn_forward.9} parent=0 // pred_check_branch
    %256 = sbr.rel (0) target = $region37
  $region36: #{gnn_forward.9} parent=0 // pred_region
    _
  $region37: #{gnn_forward.9} parent=0 // pred_fallthru
    _

</llo_original>
